<compile_context>
chip_gen: v6e
topology: v6e:2x2x1
jax: 0.10.0
libtpu: 0.0.40
codegen_flags: <defaults>
</compile_context>

<pallas_src>
import functools

import jax
import jax.numpy as jnp
from jax import lax
from jax.experimental import pallas as pl
from jax.experimental.pallas import tpu as pltpu


# ----------------------------------------------------------------------------
# Fused Pallas kernel: wavefronted [LSTM x num_layers] + Linear
# ----------------------------------------------------------------------------
def _fused_lstm_fc_kernel(*refs, num_layers, hidden_dim):
    """refs = (x, wih0, whh0, b0, [wcat_l, b_l for l>0], wfc, bfc,
               out, xp_scratch, hs_scratch)

    x    : (T, Bp, Din)   time-major, batch padded to mult. of 8, bf16
    wih0 : (Din, 4H)      layer-0 W_ih^T, gate order (i,f,o,g), bf16
    whh0 : (H,   4H)      layer-0 W_hh^T, bf16
    b0   : (1,   4H)      b_ih + b_hh, f32
    wcat : (2H,  4H)      [W_ih^T ; W_hh^T] for layers > 0, bf16
    b    : (1,   4H)      f32
    wfc  : (H, O) bf16 ;  bfc : (1, O) f32
    out  : (T, Bp, O) f32
    xp_scratch : VMEM (T, Bp, 4H) f32   hoisted layer-0 input projection
    hs_scratch : VMEM (T, Bp, H)  f32   last-layer hidden states
    """
    x_ref = refs[0]
    n_w = 3 + 2 * (num_layers - 1)
    layer_refs = refs[1:1 + n_w]
    wfc_ref = refs[1 + n_w]
    bfc_ref = refs[2 + n_w]
    out_ref = refs[3 + n_w]
    xp_ref = refs[4 + n_w]
    hs_ref = refs[5 + n_w]

    T, Bp, Din = x_ref.shape
    H = hidden_dim
    cdt = wfc_ref.dtype  # MXU compute dtype (bf16)

    wih0 = layer_refs[0][...]
    whh0 = layer_refs[1][...]
    b0 = layer_refs[2][...]
    upper = []
    for l in range(1, num_layers):
        upper.append((layer_refs[3 + 2 * (l - 1)][...],
                      layer_refs[4 + 2 * (l - 1)][...]))

    # ---- Hoisted layer-0 input projection: one big MXU matmul, spilled to VMEM.
    x_flat = x_ref[...].reshape(T * Bp, Din)            # tile-aligned (Bp % 8 == 0)
    xp_ref[...] = (
        jnp.dot(x_flat, wih0, preferred_element_type=jnp.float32) + b0
    ).reshape(T, Bp, 4 * H)

    def lstm_cell(gates, c):
        # gates (Bp, 4H) f32, gate order (i, f, o, g): lane-contiguous slices.
        sig = jax.nn.sigmoid(gates[:, : 3 * H])          # i, f, o in one EUP pass
        g_g = jnp.tanh(gates[:, 3 * H:])                 # g in one EUP pass
        i_g = sig[:, 0 * H:1 * H]
        f_g = sig[:, 1 * H:2 * H]
        o_g = sig[:, 2 * H:3 * H]
        c_new = f_g * c + i_g * g_g
        h_new = o_g * jnp.tanh(c_new)
        return h_new, c_new

    h = [jnp.zeros((Bp, H), jnp.float32) for _ in range(num_layers)]
    c = [jnp.zeros((Bp, H), jnp.float32) for _ in range(num_layers)]

    # ---- Wavefront: each timestep flows through all layers before t+1 starts.
    #      T is small & static -> fully unrolled (static slice indices).
    for t in range(T):
        gates0 = xp_ref[t] + jnp.dot(
            h[0].astype(cdt), whh0, preferred_element_type=jnp.float32)
        h[0], c[0] = lstm_cell(gates0, c[0])
        for l in range(1, num_layers):
            wcat, b_l = upper[l - 1]
            lhs = jnp.concatenate([h[l - 1], h[l]], axis=-1).astype(cdt)  # (Bp, 2H)
            gates = jnp.dot(lhs, wcat, preferred_element_type=jnp.float32) + b_l
            h[l], c[l] = lstm_cell(gates, c[l])
        hs_ref[t] = h[num_layers - 1]

    # ---- Final fc on all timesteps at once (one hoisted MXU matmul).
    hid = hs_ref[...].reshape(T * Bp, H).astype(cdt)
    out = jnp.dot(hid, wfc_ref[...], preferred_element_type=jnp.float32) + bfc_ref[...]
    out_ref[...] = out.reshape(T, Bp, -1)


# ----------------------------------------------------------------------------
# Parameter preparation (done ONCE, outside the hot path)
# ----------------------------------------------------------------------------
def _permute_gate_rows(w, H):
    """PyTorch gate order (i,f,g,o) along dim0 -> (i,f,o,g)."""
    return jnp.concatenate(
        [w[0 * H:1 * H], w[1 * H:2 * H], w[3 * H:4 * H], w[2 * H:3 * H]], axis=0)


def prepare_params(raw, compute_dtype=jnp.bfloat16):
    """Permute gates, transpose weights, combine biases, cast matmul operands."""
    H = int(raw["lstm_layers"][0]["w_hh"].shape[1])
    layers = []
    for l, lyr in enumerate(raw["lstm_layers"]):
        wih_t = _permute_gate_rows(jnp.asarray(lyr["w_ih"], jnp.float32), H).T  # (Din,4H)
        whh_t = _permute_gate_rows(jnp.asarray(lyr["w_hh"], jnp.float32), H).T  # (H,  4H)
        b = (_permute_gate_rows(jnp.asarray(lyr["b_ih"], jnp.float32), H)
             + _permute_gate_rows(jnp.asarray(lyr["b_hh"], jnp.float32), H)
             ).reshape(1, -1)                                                    # (1,  4H)
        if l == 0:
            layers.append(dict(wih=wih_t.astype(compute_dtype),
                               whh=whh_t.astype(compute_dtype), b=b))
        else:
            # Fused [W_ih^T ; W_hh^T] so upper layers do ONE K=2H matmul/step.
            layers.append(dict(
                wcat=jnp.concatenate([wih_t, whh_t], axis=0).astype(compute_dtype),
                b=b))
    return dict(
        layers=layers,
        wfc=jnp.asarray(raw["fc_w"], jnp.float32).T.astype(compute_dtype),  # (H, O)
        bfc=jnp.asarray(raw["fc_b"], jnp.float32).reshape(1, -1),           # (1, O)
        hidden_dim=H,
        compute_dtype=compute_dtype,
    )


# ----------------------------------------------------------------------------
# Forward wrapper (one pallas_call for the whole network)
# ----------------------------------------------------------------------------
def custom_rnn_forward(x, prep):
    """x: (B, T, input_dim) -> (B, T, output_dim)."""
    if x.ndim != 3:
        raise ValueError("Input tensor must have shape (batch_size, seq_length, input_dim)")
    B, T, _ = x.shape
    H = prep["hidden_dim"]
    O = prep["bfc"].shape[-1]
    cdt = prep["compute_dtype"]
    num_layers = len(prep["layers"])

    # Pad batch (sublane dim) to a multiple of 8 so every vreg is full and
    # in-kernel (T, Bp) merges are tile-aligned.
    Bp = ((B + 7) // 8) * 8
    # TODO(synk): accept time-major input / fold this transpose+cast+pad into
    #             the kernel's hoisted layer-0 matmul to save an HBM pass.
    x_tm = jnp.transpose(x, (1, 0, 2))                 # (T, B, Din)
    x_tm = jnp.pad(x_tm, ((0, 0), (0, Bp - B), (0, 0))).astype(cdt)

    args = [x_tm]
    args += [prep["layers"][0]["wih"], prep["layers"][0]["whh"], prep["layers"][0]["b"]]
    for lyr in prep["layers"][1:]:
        args += [lyr["wcat"], lyr["b"]]
    args += [prep["wfc"], prep["bfc"]]

    vmem = pl.BlockSpec(memory_space=pltpu.MemorySpace.VMEM)
    kernel = functools.partial(
        _fused_lstm_fc_kernel, num_layers=num_layers, hidden_dim=H)

    out_tm = pl.pallas_call(
        kernel,
        out_shape=jax.ShapeDtypeStruct((T, Bp, O), jnp.float32),
        in_specs=[vmem] * len(args),
        out_specs=vmem,
        scratch_shapes=[
            pltpu.VMEM((T, Bp, 4 * H), jnp.float32),   # hoisted layer-0 x-projection
            pltpu.VMEM((T, Bp, H), jnp.float32),       # last-layer hidden states
        ],
    )(*args)
    return jnp.transpose(out_tm[:, :B, :], (1, 0, 2))  # back to batch_first (B, T, O)


# ----------------------------------------------------------------------------
# Deterministic parameter init (mimics PyTorch uniform(-1/sqrt(H), 1/sqrt(H)))
# ----------------------------------------------------------------------------
def init_params(key, input_dim, hidden_dim, n_layers, output_dim):
    bound = 1.0 / jnp.sqrt(hidden_dim)
    layers = []
    for l in range(n_layers):
        din = input_dim if l == 0 else hidden_dim
        key, k1, k2, k3, k4 = jax.random.split(key, 5)
        layers.append(dict(
            w_ih=jax.random.uniform(k1, (4 * hidden_dim, din), jnp.float32, -bound, bound),
            w_hh=jax.random.uniform(k2, (4 * hidden_dim, hidden_dim), jnp.float32, -bound, bound),
            b_ih=jax.random.uniform(k3, (4 * hidden_dim,), jnp.float32, -bound, bound),
            b_hh=jax.random.uniform(k4, (4 * hidden_dim,), jnp.float32, -bound, bound),
        ))
    key, k5, k6 = jax.random.split(key, 3)
    fc_w = jax.random.uniform(k5, (output_dim, hidden_dim), jnp.float32, -bound, bound)
    fc_b = jax.random.uniform(k6, (output_dim,), jnp.float32, -bound, bound)
    return dict(lstm_layers=layers, fc_w=fc_w, fc_b=fc_b)


# ----------------------------------------------------------------------------
# Pure-JAX f32 reference in PyTorch gate order, built from the RAW weights
# (validates the gate permutation + bias combine + bf16 recipe, not the kernel
#  against itself).
# ----------------------------------------------------------------------------
def reference_forward(x, raw):
    B, T, _ = x.shape
    H = raw["lstm_layers"][0]["w_hh"].shape[1]
    cur = x  # (B, T, Din), f32
    for lyr in raw["lstm_layers"]:
        w_ih, w_hh = lyr["w_ih"], lyr["w_hh"]         # (4H,Din), (4H,H)
        b = lyr["b_ih"] + lyr["b_hh"]

        def step(carry, x_t, w_ih=w_ih, w_hh=w_hh, b=b):
            h, c = carry
            gates = x_t @ w_ih.T + h @ w_hh.T + b     # torch order (i,f,g,o)
            i = jax.nn.sigmoid(gates[:, 0 * H:1 * H])
            f = jax.nn.sigmoid(gates[:, 1 * H:2 * H])
            g = jnp.tanh(gates[:, 2 * H:3 * H])
            o = jax.nn.sigmoid(gates[:, 3 * H:4 * H])
            c = f * c + i * g
            h = o * jnp.tanh(c)
            return (h, c), h

        xs = jnp.transpose(cur, (1, 0, 2))            # (T, B, Din)
        init = (jnp.zeros((B, H), jnp.float32), jnp.zeros((B, H), jnp.float32))
        _, hseq = lax.scan(step, init, xs)
        cur = jnp.transpose(hseq, (1, 0, 2))
    return cur @ raw["fc_w"].T + raw["fc_b"]


if __name__ == "__main__":
    # Module hyperparameters (LSTM variant of CustomRNN)
    input_dim, hidden_dim, n_rnn_layers, output_dim = 16, 32, 2, 8
    batch, seq = 2, 8

    key = jax.random.PRNGKey(0)
    key, pkey, xkey = jax.random.split(key, 3)
    raw_params = init_params(pkey, input_dim, hidden_dim, n_rnn_layers, output_dim)
    prep = prepare_params(raw_params)
    x = jax.random.normal(xkey, (batch, seq, input_dim), jnp.float32)

    out = jax.block_until_ready(custom_rnn_forward(x, prep))
    ref = jax.block_until_ready(reference_forward(x, raw_params))

    assert out.shape == (batch, seq, output_dim)
    assert jnp.allclose(out, ref, atol=3e-2, rtol=3e-2), "mismatch vs f32 reference"

    print("KERNEL_OK")
</pallas_src>

<mosaic_0001>
module attributes {stable_mosaic.version = 11 : i64} {
  func.func @_fused_lstm_fc_kernel(%arg0: memref<8x8x16xbf16, #tpu.memory_space<vmem>>, %arg1: memref<16x128xbf16, #tpu.memory_space<vmem>>, %arg2: memref<32x128xbf16, #tpu.memory_space<vmem>>, %arg3: memref<1x128xf32, #tpu.memory_space<vmem>>, %arg4: memref<64x128xbf16, #tpu.memory_space<vmem>>, %arg5: memref<1x128xf32, #tpu.memory_space<vmem>>, %arg6: memref<32x8xbf16, #tpu.memory_space<vmem>>, %arg7: memref<1x8xf32, #tpu.memory_space<vmem>>, %arg8: memref<8x8x8xf32, #tpu.memory_space<vmem>>, %arg9: memref<8x8x128xf32, #tpu.memory_space<vmem>>, %arg10: memref<8x8x32xf32, #tpu.memory_space<vmem>>) attributes {dimension_semantics = [], scalar_prefetch = 0 : i64, scratch_operands = 2 : i64, tpu.core_type = #tpu.core_type<tc>} {
    %c0 = arith.constant 0 : index
    %c0_0 = arith.constant 0 : index
    %0 = vector.load %arg1[%c0, %c0_0] : memref<16x128xbf16, #tpu.memory_space<vmem>>, vector<16x128xbf16>
    %c0_1 = arith.constant 0 : index
    %c0_2 = arith.constant 0 : index
    %1 = vector.load %arg2[%c0_1, %c0_2] : memref<32x128xbf16, #tpu.memory_space<vmem>>, vector<32x128xbf16>
    %c0_3 = arith.constant 0 : index
    %c0_4 = arith.constant 0 : index
    %2 = vector.load %arg3[%c0_3, %c0_4] : memref<1x128xf32, #tpu.memory_space<vmem>>, vector<1x128xf32>
    %c0_5 = arith.constant 0 : index
    %c0_6 = arith.constant 0 : index
    %3 = vector.load %arg4[%c0_5, %c0_6] : memref<64x128xbf16, #tpu.memory_space<vmem>>, vector<64x128xbf16>
    %c0_7 = arith.constant 0 : index
    %c0_8 = arith.constant 0 : index
    %4 = vector.load %arg5[%c0_7, %c0_8] : memref<1x128xf32, #tpu.memory_space<vmem>>, vector<1x128xf32>
    %c0_9 = arith.constant 0 : index
    %c0_10 = arith.constant 0 : index
    %c0_11 = arith.constant 0 : index
    %5 = vector.load %arg0[%c0_9, %c0_10, %c0_11] : memref<8x8x16xbf16, #tpu.memory_space<vmem>>, vector<8x8x16xbf16>
    %6 = vector.shape_cast %5 : vector<8x8x16xbf16> to vector<64x16xbf16>
    %cst = arith.constant dense<0.000000e+00> : vector<64x128xf32>
    %7 = tpu.matmul %6, %0, %cst {dimension_numbers = #tpu.dot_dimension_numbers<[1], [0], [0], [1], [0, 0, 1, 1], [], []>} : vector<64x16xbf16>, vector<16x128xbf16>, vector<64x128xf32> -> vector<64x128xf32>
    %8 = vector.broadcast %2 : vector<1x128xf32> to vector<64x128xf32>
    %9 = arith.addf %7, %8 : vector<64x128xf32>
    %10 = vector.shape_cast %9 : vector<64x128xf32> to vector<8x8x128xf32>
    %c0_12 = arith.constant 0 : index
    %c0_13 = arith.constant 0 : index
    %c0_14 = arith.constant 0 : index
    %11 = vector.load %arg9[%c0_12, %c0_13, %c0_14] : memref<8x8x128xf32, #tpu.memory_space<vmem>>, vector<8x8x128xf32>
    tpu.vector_store %arg9[%c0_12, %c0_13, %c0_14], %10 {strides = array<i32>} : memref<8x8x128xf32, #tpu.memory_space<vmem>>, vector<8x8x128xf32>,
    %cst_15 = arith.constant 0.000000e+00 : f32
    %12 = vector.broadcast %cst_15 : f32 to vector<8x32xf32>
    %cst_16 = arith.constant 0.000000e+00 : f32
    %13 = vector.broadcast %cst_16 : f32 to vector<8x32xf32>
    %cst_17 = arith.constant 0.000000e+00 : f32
    %14 = vector.broadcast %cst_17 : f32 to vector<8x32xf32>
    %cst_18 = arith.constant 0.000000e+00 : f32
    %15 = vector.broadcast %cst_18 : f32 to vector<8x32xf32>
    %c0_19 = arith.constant 0 : index
    %c0_20 = arith.constant 0 : index
    %c0_21 = arith.constant 0 : index
    %16 = vector.load %arg9[%c0_19, %c0_20, %c0_21] : memref<8x8x128xf32, #tpu.memory_space<vmem>>, vector<1x8x128xf32>
    %17 = vector.shape_cast %16 : vector<1x8x128xf32> to vector<8x128xf32>
    %18 = arith.truncf %12 : vector<8x32xf32> to vector<8x32xbf16>
    %cst_22 = arith.constant dense<0.000000e+00> : vector<8x128xf32>
    %19 = tpu.matmul %18, %1, %cst_22 {dimension_numbers = #tpu.dot_dimension_numbers<[1], [0], [0], [1], [0, 0, 1, 1], [], []>} : vector<8x32xbf16>, vector<32x128xbf16>, vector<8x128xf32> -> vector<8x128xf32>
    %20 = arith.addf %17, %19 : vector<8x128xf32>
    %21 = vector.extract_strided_slice %20 {offsets = [0, 0], sizes = [8, 96], strides = [1, 1]} : vector<8x128xf32> to vector<8x96xf32>
    %22 = arith.negf %21 : vector<8x96xf32>
    %23 = math.exp %22 : vector<8x96xf32>
    %cst_23 = arith.constant 1.000000e+00 : f32
    %24 = vector.broadcast %cst_23 : f32 to vector<8x96xf32>
    %25 = arith.addf %24, %23 : vector<8x96xf32>
    %26 = arith.divf %24, %25 : vector<8x96xf32>
    %27 = vector.extract_strided_slice %20 {offsets = [0, 96], sizes = [8, 32], strides = [1, 1]} : vector<8x128xf32> to vector<8x32xf32>
    %28 = math.tanh %27 : vector<8x32xf32>
    %29 = vector.extract_strided_slice %26 {offsets = [0, 0], sizes = [8, 32], strides = [1, 1]} : vector<8x96xf32> to vector<8x32xf32>
    %30 = vector.extract_strided_slice %26 {offsets = [0, 32], sizes = [8, 32], strides = [1, 1]} : vector<8x96xf32> to vector<8x32xf32>
    %31 = vector.extract_strided_slice %26 {offsets = [0, 64], sizes = [8, 32], strides = [1, 1]} : vector<8x96xf32> to vector<8x32xf32>
    %32 = arith.mulf %30, %14 : vector<8x32xf32>
    %33 = arith.mulf %29, %28 : vector<8x32xf32>
    %34 = arith.addf %32, %33 : vector<8x32xf32>
    %35 = math.tanh %34 : vector<8x32xf32>
    %36 = arith.mulf %31, %35 : vector<8x32xf32>
    %37 = tpu.concatenate %36, %13 in 1 : vector<8x32xf32>, vector<8x32xf32> -> vector<8x64xf32>
    %38 = arith.truncf %37 : vector<8x64xf32> to vector<8x64xbf16>
    %cst_24 = arith.constant dense<0.000000e+00> : vector<8x128xf32>
    %39 = tpu.matmul %38, %3, %cst_24 {dimension_numbers = #tpu.dot_dimension_numbers<[1], [0], [0], [1], [0, 0, 1, 1], [], []>} : vector<8x64xbf16>, vector<64x128xbf16>, vector<8x128xf32> -> vector<8x128xf32>
    %40 = vector.broadcast %4 : vector<1x128xf32> to vector<8x128xf32>
    %41 = arith.addf %39, %40 : vector<8x128xf32>
    %42 = vector.extract_strided_slice %41 {offsets = [0, 0], sizes = [8, 96], strides = [1, 1]} : vector<8x128xf32> to vector<8x96xf32>
    %43 = arith.negf %42 : vector<8x96xf32>
    %44 = math.exp %43 : vector<8x96xf32>
    %cst_25 = arith.constant 1.000000e+00 : f32
    %45 = vector.broadcast %cst_25 : f32 to vector<8x96xf32>
    %46 = arith.addf %45, %44 : vector<8x96xf32>
    %47 = arith.divf %45, %46 : vector<8x96xf32>
    %48 = vector.extract_strided_slice %41 {offsets = [0, 96], sizes = [8, 32], strides = [1, 1]} : vector<8x128xf32> to vector<8x32xf32>
    %49 = math.tanh %48 : vector<8x32xf32>
    %50 = vector.extract_strided_slice %47 {offsets = [0, 0], sizes = [8, 32], strides = [1, 1]} : vector<8x96xf32> to vector<8x32xf32>
    %51 = vector.extract_strided_slice %47 {offsets = [0, 32], sizes = [8, 32], strides = [1, 1]} : vector<8x96xf32> to vector<8x32xf32>
    %52 = vector.extract_strided_slice %47 {offsets = [0, 64], sizes = [8, 32], strides = [1, 1]} : vector<8x96xf32> to vector<8x32xf32>
    %53 = arith.mulf %51, %15 : vector<8x32xf32>
    %54 = arith.mulf %50, %49 : vector<8x32xf32>
    %55 = arith.addf %53, %54 : vector<8x32xf32>
    %56 = math.tanh %55 : vector<8x32xf32>
    %57 = arith.mulf %52, %56 : vector<8x32xf32>
    %c0_26 = arith.constant 0 : index
    %c0_27 = arith.constant 0 : index
    %c0_28 = arith.constant 0 : index
    %58 = vector.load %arg10[%c0_26, %c0_27, %c0_28] : memref<8x8x32xf32, #tpu.memory_space<vmem>>, vector<1x8x32xf32>
    %59 = vector.shape_cast %58 : vector<1x8x32xf32> to vector<8x32xf32>
    %60 = vector.shape_cast %57 : vector<8x32xf32> to vector<1x8x32xf32>
    tpu.vector_store %arg10[%c0_26, %c0_27, %c0_28], %60 {strides = array<i32>} : memref<8x8x32xf32, #tpu.memory_space<vmem>>, vector<1x8x32xf32>,
    %c1 = arith.constant 1 : index
    %c0_29 = arith.constant 0 : index
    %c0_30 = arith.constant 0 : index
    %61 = vector.load %arg9[%c1, %c0_29, %c0_30] : memref<8x8x128xf32, #tpu.memory_space<vmem>>, vector<1x8x128xf32>
    %62 = vector.shape_cast %61 : vector<1x8x128xf32> to vector<8x128xf32>
    %63 = arith.truncf %36 : vector<8x32xf32> to vector<8x32xbf16>
    %cst_31 = arith.constant dense<0.000000e+00> : vector<8x128xf32>
    %64 = tpu.matmul %63, %1, %cst_31 {dimension_numbers = #tpu.dot_dimension_numbers<[1], [0], [0], [1], [0, 0, 1, 1], [], []>} : vector<8x32xbf16>, vector<32x128xbf16>, vector<8x128xf32> -> vector<8x128xf32>
    %65 = arith.addf %62, %64 : vector<8x128xf32>
    %66 = vector.extract_strided_slice %65 {offsets = [0, 0], sizes = [8, 96], strides = [1, 1]} : vector<8x128xf32> to vector<8x96xf32>
    %67 = arith.negf %66 : vector<8x96xf32>
    %68 = math.exp %67 : vector<8x96xf32>
    %cst_32 = arith.constant 1.000000e+00 : f32
    %69 = vector.broadcast %cst_32 : f32 to vector<8x96xf32>
    %70 = arith.addf %69, %68 : vector<8x96xf32>
    %71 = arith.divf %69, %70 : vector<8x96xf32>
    %72 = vector.extract_strided_slice %65 {offsets = [0, 96], sizes = [8, 32], strides = [1, 1]} : vector<8x128xf32> to vector<8x32xf32>
    %73 = math.tanh %72 : vector<8x32xf32>
    %74 = vector.extract_strided_slice %71 {offsets = [0, 0], sizes = [8, 32], strides = [1, 1]} : vector<8x96xf32> to vector<8x32xf32>
    %75 = vector.extract_strided_slice %71 {offsets = [0, 32], sizes = [8, 32], strides = [1, 1]} : vector<8x96xf32> to vector<8x32xf32>
    %76 = vector.extract_strided_slice %71 {offsets = [0, 64], sizes = [8, 32], strides = [1, 1]} : vector<8x96xf32> to vector<8x32xf32>
    %77 = arith.mulf %75, %34 : vector<8x32xf32>
    %78 = arith.mulf %74, %73 : vector<8x32xf32>
    %79 = arith.addf %77, %78 : vector<8x32xf32>
    %80 = math.tanh %79 : vector<8x32xf32>
    %81 = arith.mulf %76, %80 : vector<8x32xf32>
    %82 = tpu.concatenate %81, %57 in 1 : vector<8x32xf32>, vector<8x32xf32> -> vector<8x64xf32>
    %83 = arith.truncf %82 : vector<8x64xf32> to vector<8x64xbf16>
    %cst_33 = arith.constant dense<0.000000e+00> : vector<8x128xf32>
    %84 = tpu.matmul %83, %3, %cst_33 {dimension_numbers = #tpu.dot_dimension_numbers<[1], [0], [0], [1], [0, 0, 1, 1], [], []>} : vector<8x64xbf16>, vector<64x128xbf16>, vector<8x128xf32> -> vector<8x128xf32>
    %85 = vector.broadcast %4 : vector<1x128xf32> to vector<8x128xf32>
    %86 = arith.addf %84, %85 : vector<8x128xf32>
    %87 = vector.extract_strided_slice %86 {offsets = [0, 0], sizes = [8, 96], strides = [1, 1]} : vector<8x128xf32> to vector<8x96xf32>
    %88 = arith.negf %87 : vector<8x96xf32>
    %89 = math.exp %88 : vector<8x96xf32>
    %cst_34 = arith.constant 1.000000e+00 : f32
    %90 = vector.broadcast %cst_34 : f32 to vector<8x96xf32>
    %91 = arith.addf %90, %89 : vector<8x96xf32>
    %92 = arith.divf %90, %91 : vector<8x96xf32>
    %93 = vector.extract_strided_slice %86 {offsets = [0, 96], sizes = [8, 32], strides = [1, 1]} : vector<8x128xf32> to vector<8x32xf32>
    %94 = math.tanh %93 : vector<8x32xf32>
    %95 = vector.extract_strided_slice %92 {offsets = [0, 0], sizes = [8, 32], strides = [1, 1]} : vector<8x96xf32> to vector<8x32xf32>
    %96 = vector.extract_strided_slice %92 {offsets = [0, 32], sizes = [8, 32], strides = [1, 1]} : vector<8x96xf32> to vector<8x32xf32>
    %97 = vector.extract_strided_slice %92 {offsets = [0, 64], sizes = [8, 32], strides = [1, 1]} : vector<8x96xf32> to vector<8x32xf32>
    %98 = arith.mulf %96, %55 : vector<8x32xf32>
    %99 = arith.mulf %95, %94 : vector<8x32xf32>
    %100 = arith.addf %98, %99 : vector<8x32xf32>
    %101 = math.tanh %100 : vector<8x32xf32>
    %102 = arith.mulf %97, %101 : vector<8x32xf32>
    %c1_35 = arith.constant 1 : index
    %c0_36 = arith.constant 0 : index
    %c0_37 = arith.constant 0 : index
    %103 = vector.load %arg10[%c1_35, %c0_36, %c0_37] : memref<8x8x32xf32, #tpu.memory_space<vmem>>, vector<1x8x32xf32>
    %104 = vector.shape_cast %103 : vector<1x8x32xf32> to vector<8x32xf32>
    %105 = vector.shape_cast %102 : vector<8x32xf32> to vector<1x8x32xf32>
    tpu.vector_store %arg10[%c1_35, %c0_36, %c0_37], %105 {strides = array<i32>} : memref<8x8x32xf32, #tpu.memory_space<vmem>>, vector<1x8x32xf32>,
    %c2 = arith.constant 2 : index
    %c0_38 = arith.constant 0 : index
    %c0_39 = arith.constant 0 : index
    %106 = vector.load %arg9[%c2, %c0_38, %c0_39] : memref<8x8x128xf32, #tpu.memory_space<vmem>>, vector<1x8x128xf32>
    %107 = vector.shape_cast %106 : vector<1x8x128xf32> to vector<8x128xf32>
    %108 = arith.truncf %81 : vector<8x32xf32> to vector<8x32xbf16>
    %cst_40 = arith.constant dense<0.000000e+00> : vector<8x128xf32>
    %109 = tpu.matmul %108, %1, %cst_40 {dimension_numbers = #tpu.dot_dimension_numbers<[1], [0], [0], [1], [0, 0, 1, 1], [], []>} : vector<8x32xbf16>, vector<32x128xbf16>, vector<8x128xf32> -> vector<8x128xf32>
    %110 = arith.addf %107, %109 : vector<8x128xf32>
    %111 = vector.extract_strided_slice %110 {offsets = [0, 0], sizes = [8, 96], strides = [1, 1]} : vector<8x128xf32> to vector<8x96xf32>
    %112 = arith.negf %111 : vector<8x96xf32>
    %113 = math.exp %112 : vector<8x96xf32>
    %cst_41 = arith.constant 1.000000e+00 : f32
    %114 = vector.broadcast %cst_41 : f32 to vector<8x96xf32>
    %115 = arith.addf %114, %113 : vector<8x96xf32>
    %116 = arith.divf %114, %115 : vector<8x96xf32>
    %117 = vector.extract_strided_slice %110 {offsets = [0, 96], sizes = [8, 32], strides = [1, 1]} : vector<8x128xf32> to vector<8x32xf32>
    %118 = math.tanh %117 : vector<8x32xf32>
    %119 = vector.extract_strided_slice %116 {offsets = [0, 0], sizes = [8, 32], strides = [1, 1]} : vector<8x96xf32> to vector<8x32xf32>
    %120 = vector.extract_strided_slice %116 {offsets = [0, 32], sizes = [8, 32], strides = [1, 1]} : vector<8x96xf32> to vector<8x32xf32>
    %121 = vector.extract_strided_slice %116 {offsets = [0, 64], sizes = [8, 32], strides = [1, 1]} : vector<8x96xf32> to vector<8x32xf32>
    %122 = arith.mulf %120, %79 : vector<8x32xf32>
    %123 = arith.mulf %119, %118 : vector<8x32xf32>
    %124 = arith.addf %122, %123 : vector<8x32xf32>
    %125 = math.tanh %124 : vector<8x32xf32>
    %126 = arith.mulf %121, %125 : vector<8x32xf32>
    %127 = tpu.concatenate %126, %102 in 1 : vector<8x32xf32>, vector<8x32xf32> -> vector<8x64xf32>
    %128 = arith.truncf %127 : vector<8x64xf32> to vector<8x64xbf16>
    %cst_42 = arith.constant dense<0.000000e+00> : vector<8x128xf32>
    %129 = tpu.matmul %128, %3, %cst_42 {dimension_numbers = #tpu.dot_dimension_numbers<[1], [0], [0], [1], [0, 0, 1, 1], [], []>} : vector<8x64xbf16>, vector<64x128xbf16>, vector<8x128xf32> -> vector<8x128xf32>
    %130 = vector.broadcast %4 : vector<1x128xf32> to vector<8x128xf32>
    %131 = arith.addf %129, %130 : vector<8x128xf32>
    %132 = vector.extract_strided_slice %131 {offsets = [0, 0], sizes = [8, 96], strides = [1, 1]} : vector<8x128xf32> to vector<8x96xf32>
    %133 = arith.negf %132 : vector<8x96xf32>
    %134 = math.exp %133 : vector<8x96xf32>
    %cst_43 = arith.constant 1.000000e+00 : f32
    %135 = vector.broadcast %cst_43 : f32 to vector<8x96xf32>
    %136 = arith.addf %135, %134 : vector<8x96xf32>
    %137 = arith.divf %135, %136 : vector<8x96xf32>
    %138 = vector.extract_strided_slice %131 {offsets = [0, 96], sizes = [8, 32], strides = [1, 1]} : vector<8x128xf32> to vector<8x32xf32>
    %139 = math.tanh %138 : vector<8x32xf32>
    %140 = vector.extract_strided_slice %137 {offsets = [0, 0], sizes = [8, 32], strides = [1, 1]} : vector<8x96xf32> to vector<8x32xf32>
    %141 = vector.extract_strided_slice %137 {offsets = [0, 32], sizes = [8, 32], strides = [1, 1]} : vector<8x96xf32> to vector<8x32xf32>
    %142 = vector.extract_strided_slice %137 {offsets = [0, 64], sizes = [8, 32], strides = [1, 1]} : vector<8x96xf32> to vector<8x32xf32>
    %143 = arith.mulf %141, %100 : vector<8x32xf32>
    %144 = arith.mulf %140, %139 : vector<8x32xf32>
    %145 = arith.addf %143, %144 : vector<8x32xf32>
    %146 = math.tanh %145 : vector<8x32xf32>
    %147 = arith.mulf %142, %146 : vector<8x32xf32>
    %c2_44 = arith.constant 2 : index
    %c0_45 = arith.constant 0 : index
    %c0_46 = arith.constant 0 : index
    %148 = vector.load %arg10[%c2_44, %c0_45, %c0_46] : memref<8x8x32xf32, #tpu.memory_space<vmem>>, vector<1x8x32xf32>
    %149 = vector.shape_cast %148 : vector<1x8x32xf32> to vector<8x32xf32>
    %150 = vector.shape_cast %147 : vector<8x32xf32> to vector<1x8x32xf32>
    tpu.vector_store %arg10[%c2_44, %c0_45, %c0_46], %150 {strides = array<i32>} : memref<8x8x32xf32, #tpu.memory_space<vmem>>, vector<1x8x32xf32>,
    %c3 = arith.constant 3 : index
    %c0_47 = arith.constant 0 : index
    %c0_48 = arith.constant 0 : index
    %151 = vector.load %arg9[%c3, %c0_47, %c0_48] : memref<8x8x128xf32, #tpu.memory_space<vmem>>, vector<1x8x128xf32>
    %152 = vector.shape_cast %151 : vector<1x8x128xf32> to vector<8x128xf32>
    %153 = arith.truncf %126 : vector<8x32xf32> to vector<8x32xbf16>
    %cst_49 = arith.constant dense<0.000000e+00> : vector<8x128xf32>
    %154 = tpu.matmul %153, %1, %cst_49 {dimension_numbers = #tpu.dot_dimension_numbers<[1], [0], [0], [1], [0, 0, 1, 1], [], []>} : vector<8x32xbf16>, vector<32x128xbf16>, vector<8x128xf32> -> vector<8x128xf32>
    %155 = arith.addf %152, %154 : vector<8x128xf32>
    %156 = vector.extract_strided_slice %155 {offsets = [0, 0], sizes = [8, 96], strides = [1, 1]} : vector<8x128xf32> to vector<8x96xf32>
    %157 = arith.negf %156 : vector<8x96xf32>
    %158 = math.exp %157 : vector<8x96xf32>
    %cst_50 = arith.constant 1.000000e+00 : f32
    %159 = vector.broadcast %cst_50 : f32 to vector<8x96xf32>
    %160 = arith.addf %159, %158 : vector<8x96xf32>
    %161 = arith.divf %159, %160 : vector<8x96xf32>
    %162 = vector.extract_strided_slice %155 {offsets = [0, 96], sizes = [8, 32], strides = [1, 1]} : vector<8x128xf32> to vector<8x32xf32>
    %163 = math.tanh %162 : vector<8x32xf32>
    %164 = vector.extract_strided_slice %161 {offsets = [0, 0], sizes = [8, 32], strides = [1, 1]} : vector<8x96xf32> to vector<8x32xf32>
    %165 = vector.extract_strided_slice %161 {offsets = [0, 32], sizes = [8, 32], strides = [1, 1]} : vector<8x96xf32> to vector<8x32xf32>
    %166 = vector.extract_strided_slice %161 {offsets = [0, 64], sizes = [8, 32], strides = [1, 1]} : vector<8x96xf32> to vector<8x32xf32>
    %167 = arith.mulf %165, %124 : vector<8x32xf32>
    %168 = arith.mulf %164, %163 : vector<8x32xf32>
    %169 = arith.addf %167, %168 : vector<8x32xf32>
    %170 = math.tanh %169 : vector<8x32xf32>
    %171 = arith.mulf %166, %170 : vector<8x32xf32>
    %172 = tpu.concatenate %171, %147 in 1 : vector<8x32xf32>, vector<8x32xf32> -> vector<8x64xf32>
    %173 = arith.truncf %172 : vector<8x64xf32> to vector<8x64xbf16>
    %cst_51 = arith.constant dense<0.000000e+00> : vector<8x128xf32>
    %174 = tpu.matmul %173, %3, %cst_51 {dimension_numbers = #tpu.dot_dimension_numbers<[1], [0], [0], [1], [0, 0, 1, 1], [], []>} : vector<8x64xbf16>, vector<64x128xbf16>, vector<8x128xf32> -> vector<8x128xf32>
    %175 = vector.broadcast %4 : vector<1x128xf32> to vector<8x128xf32>
    %176 = arith.addf %174, %175 : vector<8x128xf32>
    %177 = vector.extract_strided_slice %176 {offsets = [0, 0], sizes = [8, 96], strides = [1, 1]} : vector<8x128xf32> to vector<8x96xf32>
    %178 = arith.negf %177 : vector<8x96xf32>
    %179 = math.exp %178 : vector<8x96xf32>
    %cst_52 = arith.constant 1.000000e+00 : f32
    %180 = vector.broadcast %cst_52 : f32 to vector<8x96xf32>
    %181 = arith.addf %180, %179 : vector<8x96xf32>
    %182 = arith.divf %180, %181 : vector<8x96xf32>
    %183 = vector.extract_strided_slice %176 {offsets = [0, 96], sizes = [8, 32], strides = [1, 1]} : vector<8x128xf32> to vector<8x32xf32>
    %184 = math.tanh %183 : vector<8x32xf32>
    %185 = vector.extract_strided_slice %182 {offsets = [0, 0], sizes = [8, 32], strides = [1, 1]} : vector<8x96xf32> to vector<8x32xf32>
    %186 = vector.extract_strided_slice %182 {offsets = [0, 32], sizes = [8, 32], strides = [1, 1]} : vector<8x96xf32> to vector<8x32xf32>
    %187 = vector.extract_strided_slice %182 {offsets = [0, 64], sizes = [8, 32], strides = [1, 1]} : vector<8x96xf32> to vector<8x32xf32>
    %188 = arith.mulf %186, %145 : vector<8x32xf32>
    %189 = arith.mulf %185, %184 : vector<8x32xf32>
    %190 = arith.addf %188, %189 : vector<8x32xf32>
    %191 = math.tanh %190 : vector<8x32xf32>
    %192 = arith.mulf %187, %191 : vector<8x32xf32>
    %c3_53 = arith.constant 3 : index
    %c0_54 = arith.constant 0 : index
    %c0_55 = arith.constant 0 : index
    %193 = vector.load %arg10[%c3_53, %c0_54, %c0_55] : memref<8x8x32xf32, #tpu.memory_space<vmem>>, vector<1x8x32xf32>
    %194 = vector.shape_cast %193 : vector<1x8x32xf32> to vector<8x32xf32>
    %195 = vector.shape_cast %192 : vector<8x32xf32> to vector<1x8x32xf32>
    tpu.vector_store %arg10[%c3_53, %c0_54, %c0_55], %195 {strides = array<i32>} : memref<8x8x32xf32, #tpu.memory_space<vmem>>, vector<1x8x32xf32>,
    %c4 = arith.constant 4 : index
    %c0_56 = arith.constant 0 : index
    %c0_57 = arith.constant 0 : index
    %196 = vector.load %arg9[%c4, %c0_56, %c0_57] : memref<8x8x128xf32, #tpu.memory_space<vmem>>, vector<1x8x128xf32>
    %197 = vector.shape_cast %196 : vector<1x8x128xf32> to vector<8x128xf32>
    %198 = arith.truncf %171 : vector<8x32xf32> to vector<8x32xbf16>
    %cst_58 = arith.constant dense<0.000000e+00> : vector<8x128xf32>
    %199 = tpu.matmul %198, %1, %cst_58 {dimension_numbers = #tpu.dot_dimension_numbers<[1], [0], [0], [1], [0, 0, 1, 1], [], []>} : vector<8x32xbf16>, vector<32x128xbf16>, vector<8x128xf32> -> vector<8x128xf32>
    %200 = arith.addf %197, %199 : vector<8x128xf32>
    %201 = vector.extract_strided_slice %200 {offsets = [0, 0], sizes = [8, 96], strides = [1, 1]} : vector<8x128xf32> to vector<8x96xf32>
    %202 = arith.negf %201 : vector<8x96xf32>
    %203 = math.exp %202 : vector<8x96xf32>
    %cst_59 = arith.constant 1.000000e+00 : f32
    %204 = vector.broadcast %cst_59 : f32 to vector<8x96xf32>
    %205 = arith.addf %204, %203 : vector<8x96xf32>
    %206 = arith.divf %204, %205 : vector<8x96xf32>
    %207 = vector.extract_strided_slice %200 {offsets = [0, 96], sizes = [8, 32], strides = [1, 1]} : vector<8x128xf32> to vector<8x32xf32>
    %208 = math.tanh %207 : vector<8x32xf32>
    %209 = vector.extract_strided_slice %206 {offsets = [0, 0], sizes = [8, 32], strides = [1, 1]} : vector<8x96xf32> to vector<8x32xf32>
    %210 = vector.extract_strided_slice %206 {offsets = [0, 32], sizes = [8, 32], strides = [1, 1]} : vector<8x96xf32> to vector<8x32xf32>
    %211 = vector.extract_strided_slice %206 {offsets = [0, 64], sizes = [8, 32], strides = [1, 1]} : vector<8x96xf32> to vector<8x32xf32>
    %212 = arith.mulf %210, %169 : vector<8x32xf32>
    %213 = arith.mulf %209, %208 : vector<8x32xf32>
    %214 = arith.addf %212, %213 : vector<8x32xf32>
    %215 = math.tanh %214 : vector<8x32xf32>
    %216 = arith.mulf %211, %215 : vector<8x32xf32>
    %217 = tpu.concatenate %216, %192 in 1 : vector<8x32xf32>, vector<8x32xf32> -> vector<8x64xf32>
    %218 = arith.truncf %217 : vector<8x64xf32> to vector<8x64xbf16>
    %cst_60 = arith.constant dense<0.000000e+00> : vector<8x128xf32>
    %219 = tpu.matmul %218, %3, %cst_60 {dimension_numbers = #tpu.dot_dimension_numbers<[1], [0], [0], [1], [0, 0, 1, 1], [], []>} : vector<8x64xbf16>, vector<64x128xbf16>, vector<8x128xf32> -> vector<8x128xf32>
    %220 = vector.broadcast %4 : vector<1x128xf32> to vector<8x128xf32>
    %221 = arith.addf %219, %220 : vector<8x128xf32>
    %222 = vector.extract_strided_slice %221 {offsets = [0, 0], sizes = [8, 96], strides = [1, 1]} : vector<8x128xf32> to vector<8x96xf32>
    %223 = arith.negf %222 : vector<8x96xf32>
    %224 = math.exp %223 : vector<8x96xf32>
    %cst_61 = arith.constant 1.000000e+00 : f32
    %225 = vector.broadcast %cst_61 : f32 to vector<8x96xf32>
    %226 = arith.addf %225, %224 : vector<8x96xf32>
    %227 = arith.divf %225, %226 : vector<8x96xf32>
    %228 = vector.extract_strided_slice %221 {offsets = [0, 96], sizes = [8, 32], strides = [1, 1]} : vector<8x128xf32> to vector<8x32xf32>
    %229 = math.tanh %228 : vector<8x32xf32>
    %230 = vector.extract_strided_slice %227 {offsets = [0, 0], sizes = [8, 32], strides = [1, 1]} : vector<8x96xf32> to vector<8x32xf32>
    %231 = vector.extract_strided_slice %227 {offsets = [0, 32], sizes = [8, 32], strides = [1, 1]} : vector<8x96xf32> to vector<8x32xf32>
    %232 = vector.extract_strided_slice %227 {offsets = [0, 64], sizes = [8, 32], strides = [1, 1]} : vector<8x96xf32> to vector<8x32xf32>
    %233 = arith.mulf %231, %190 : vector<8x32xf32>
    %234 = arith.mulf %230, %229 : vector<8x32xf32>
    %235 = arith.addf %233, %234 : vector<8x32xf32>
    %236 = math.tanh %235 : vector<8x32xf32>
    %237 = arith.mulf %232, %236 : vector<8x32xf32>
    %c4_62 = arith.constant 4 : index
    %c0_63 = arith.constant 0 : index
    %c0_64 = arith.constant 0 : index
    %238 = vector.load %arg10[%c4_62, %c0_63, %c0_64] : memref<8x8x32xf32, #tpu.memory_space<vmem>>, vector<1x8x32xf32>
    %239 = vector.shape_cast %238 : vector<1x8x32xf32> to vector<8x32xf32>
    %240 = vector.shape_cast %237 : vector<8x32xf32> to vector<1x8x32xf32>
    tpu.vector_store %arg10[%c4_62, %c0_63, %c0_64], %240 {strides = array<i32>} : memref<8x8x32xf32, #tpu.memory_space<vmem>>, vector<1x8x32xf32>,
    %c5 = arith.constant 5 : index
    %c0_65 = arith.constant 0 : index
    %c0_66 = arith.constant 0 : index
    %241 = vector.load %arg9[%c5, %c0_65, %c0_66] : memref<8x8x128xf32, #tpu.memory_space<vmem>>, vector<1x8x128xf32>
    %242 = vector.shape_cast %241 : vector<1x8x128xf32> to vector<8x128xf32>
    %243 = arith.truncf %216 : vector<8x32xf32> to vector<8x32xbf16>
    %cst_67 = arith.constant dense<0.000000e+00> : vector<8x128xf32>
    %244 = tpu.matmul %243, %1, %cst_67 {dimension_numbers = #tpu.dot_dimension_numbers<[1], [0], [0], [1], [0, 0, 1, 1], [], []>} : vector<8x32xbf16>, vector<32x128xbf16>, vector<8x128xf32> -> vector<8x128xf32>
    %245 = arith.addf %242, %244 : vector<8x128xf32>
    %246 = vector.extract_strided_slice %245 {offsets = [0, 0], sizes = [8, 96], strides = [1, 1]} : vector<8x128xf32> to vector<8x96xf32>
    %247 = arith.negf %246 : vector<8x96xf32>
    %248 = math.exp %247 : vector<8x96xf32>
    %cst_68 = arith.constant 1.000000e+00 : f32
    %249 = vector.broadcast %cst_68 : f32 to vector<8x96xf32>
    %250 = arith.addf %249, %248 : vector<8x96xf32>
    %251 = arith.divf %249, %250 : vector<8x96xf32>
    %252 = vector.extract_strided_slice %245 {offsets = [0, 96], sizes = [8, 32], strides = [1, 1]} : vector<8x128xf32> to vector<8x32xf32>
    %253 = math.tanh %252 : vector<8x32xf32>
    %254 = vector.extract_strided_slice %251 {offsets = [0, 0], sizes = [8, 32], strides = [1, 1]} : vector<8x96xf32> to vector<8x32xf32>
    %255 = vector.extract_strided_slice %251 {offsets = [0, 32], sizes = [8, 32], strides = [1, 1]} : vector<8x96xf32> to vector<8x32xf32>
    %256 = vector.extract_strided_slice %251 {offsets = [0, 64], sizes = [8, 32], strides = [1, 1]} : vector<8x96xf32> to vector<8x32xf32>
    %257 = arith.mulf %255, %214 : vector<8x32xf32>
    %258 = arith.mulf %254, %253 : vector<8x32xf32>
    %259 = arith.addf %257, %258 : vector<8x32xf32>
    %260 = math.tanh %259 : vector<8x32xf32>
    %261 = arith.mulf %256, %260 : vector<8x32xf32>
    %262 = tpu.concatenate %261, %237 in 1 : vector<8x32xf32>, vector<8x32xf32> -> vector<8x64xf32>
    %263 = arith.truncf %262 : vector<8x64xf32> to vector<8x64xbf16>
    %cst_69 = arith.constant dense<0.000000e+00> : vector<8x128xf32>
    %264 = tpu.matmul %263, %3, %cst_69 {dimension_numbers = #tpu.dot_dimension_numbers<[1], [0], [0], [1], [0, 0, 1, 1], [], []>} : vector<8x64xbf16>, vector<64x128xbf16>, vector<8x128xf32> -> vector<8x128xf32>
    %265 = vector.broadcast %4 : vector<1x128xf32> to vector<8x128xf32>
    %266 = arith.addf %264, %265 : vector<8x128xf32>
    %267 = vector.extract_strided_slice %266 {offsets = [0, 0], sizes = [8, 96], strides = [1, 1]} : vector<8x128xf32> to vector<8x96xf32>
    %268 = arith.negf %267 : vector<8x96xf32>
    %269 = math.exp %268 : vector<8x96xf32>
    %cst_70 = arith.constant 1.000000e+00 : f32
    %270 = vector.broadcast %cst_70 : f32 to vector<8x96xf32>
    %271 = arith.addf %270, %269 : vector<8x96xf32>
    %272 = arith.divf %270, %271 : vector<8x96xf32>
    %273 = vector.extract_strided_slice %266 {offsets = [0, 96], sizes = [8, 32], strides = [1, 1]} : vector<8x128xf32> to vector<8x32xf32>
    %274 = math.tanh %273 : vector<8x32xf32>
    %275 = vector.extract_strided_slice %272 {offsets = [0, 0], sizes = [8, 32], strides = [1, 1]} : vector<8x96xf32> to vector<8x32xf32>
    %276 = vector.extract_strided_slice %272 {offsets = [0, 32], sizes = [8, 32], strides = [1, 1]} : vector<8x96xf32> to vector<8x32xf32>
    %277 = vector.extract_strided_slice %272 {offsets = [0, 64], sizes = [8, 32], strides = [1, 1]} : vector<8x96xf32> to vector<8x32xf32>
    %278 = arith.mulf %276, %235 : vector<8x32xf32>
    %279 = arith.mulf %275, %274 : vector<8x32xf32>
    %280 = arith.addf %278, %279 : vector<8x32xf32>
    %281 = math.tanh %280 : vector<8x32xf32>
    %282 = arith.mulf %277, %281 : vector<8x32xf32>
    %c5_71 = arith.constant 5 : index
    %c0_72 = arith.constant 0 : index
    %c0_73 = arith.constant 0 : index
    %283 = vector.load %arg10[%c5_71, %c0_72, %c0_73] : memref<8x8x32xf32, #tpu.memory_space<vmem>>, vector<1x8x32xf32>
    %284 = vector.shape_cast %283 : vector<1x8x32xf32> to vector<8x32xf32>
    %285 = vector.shape_cast %282 : vector<8x32xf32> to vector<1x8x32xf32>
    tpu.vector_store %arg10[%c5_71, %c0_72, %c0_73], %285 {strides = array<i32>} : memref<8x8x32xf32, #tpu.memory_space<vmem>>, vector<1x8x32xf32>,
    %c6 = arith.constant 6 : index
    %c0_74 = arith.constant 0 : index
    %c0_75 = arith.constant 0 : index
    %286 = vector.load %arg9[%c6, %c0_74, %c0_75] : memref<8x8x128xf32, #tpu.memory_space<vmem>>, vector<1x8x128xf32>
    %287 = vector.shape_cast %286 : vector<1x8x128xf32> to vector<8x128xf32>
    %288 = arith.truncf %261 : vector<8x32xf32> to vector<8x32xbf16>
    %cst_76 = arith.constant dense<0.000000e+00> : vector<8x128xf32>
    %289 = tpu.matmul %288, %1, %cst_76 {dimension_numbers = #tpu.dot_dimension_numbers<[1], [0], [0], [1], [0, 0, 1, 1], [], []>} : vector<8x32xbf16>, vector<32x128xbf16>, vector<8x128xf32> -> vector<8x128xf32>
    %290 = arith.addf %287, %289 : vector<8x128xf32>
    %291 = vector.extract_strided_slice %290 {offsets = [0, 0], sizes = [8, 96], strides = [1, 1]} : vector<8x128xf32> to vector<8x96xf32>
    %292 = arith.negf %291 : vector<8x96xf32>
    %293 = math.exp %292 : vector<8x96xf32>
    %cst_77 = arith.constant 1.000000e+00 : f32
    %294 = vector.broadcast %cst_77 : f32 to vector<8x96xf32>
    %295 = arith.addf %294, %293 : vector<8x96xf32>
    %296 = arith.divf %294, %295 : vector<8x96xf32>
    %297 = vector.extract_strided_slice %290 {offsets = [0, 96], sizes = [8, 32], strides = [1, 1]} : vector<8x128xf32> to vector<8x32xf32>
    %298 = math.tanh %297 : vector<8x32xf32>
    %299 = vector.extract_strided_slice %296 {offsets = [0, 0], sizes = [8, 32], strides = [1, 1]} : vector<8x96xf32> to vector<8x32xf32>
    %300 = vector.extract_strided_slice %296 {offsets = [0, 32], sizes = [8, 32], strides = [1, 1]} : vector<8x96xf32> to vector<8x32xf32>
    %301 = vector.extract_strided_slice %296 {offsets = [0, 64], sizes = [8, 32], strides = [1, 1]} : vector<8x96xf32> to vector<8x32xf32>
    %302 = arith.mulf %300, %259 : vector<8x32xf32>
    %303 = arith.mulf %299, %298 : vector<8x32xf32>
    %304 = arith.addf %302, %303 : vector<8x32xf32>
    %305 = math.tanh %304 : vector<8x32xf32>
    %306 = arith.mulf %301, %305 : vector<8x32xf32>
    %307 = tpu.concatenate %306, %282 in 1 : vector<8x32xf32>, vector<8x32xf32> -> vector<8x64xf32>
    %308 = arith.truncf %307 : vector<8x64xf32> to vector<8x64xbf16>
    %cst_78 = arith.constant dense<0.000000e+00> : vector<8x128xf32>
    %309 = tpu.matmul %308, %3, %cst_78 {dimension_numbers = #tpu.dot_dimension_numbers<[1], [0], [0], [1], [0, 0, 1, 1], [], []>} : vector<8x64xbf16>, vector<64x128xbf16>, vector<8x128xf32> -> vector<8x128xf32>
    %310 = vector.broadcast %4 : vector<1x128xf32> to vector<8x128xf32>
    %311 = arith.addf %309, %310 : vector<8x128xf32>
    %312 = vector.extract_strided_slice %311 {offsets = [0, 0], sizes = [8, 96], strides = [1, 1]} : vector<8x128xf32> to vector<8x96xf32>
    %313 = arith.negf %312 : vector<8x96xf32>
    %314 = math.exp %313 : vector<8x96xf32>
    %cst_79 = arith.constant 1.000000e+00 : f32
    %315 = vector.broadcast %cst_79 : f32 to vector<8x96xf32>
    %316 = arith.addf %315, %314 : vector<8x96xf32>
    %317 = arith.divf %315, %316 : vector<8x96xf32>
    %318 = vector.extract_strided_slice %311 {offsets = [0, 96], sizes = [8, 32], strides = [1, 1]} : vector<8x128xf32> to vector<8x32xf32>
    %319 = math.tanh %318 : vector<8x32xf32>
    %320 = vector.extract_strided_slice %317 {offsets = [0, 0], sizes = [8, 32], strides = [1, 1]} : vector<8x96xf32> to vector<8x32xf32>
    %321 = vector.extract_strided_slice %317 {offsets = [0, 32], sizes = [8, 32], strides = [1, 1]} : vector<8x96xf32> to vector<8x32xf32>
    %322 = vector.extract_strided_slice %317 {offsets = [0, 64], sizes = [8, 32], strides = [1, 1]} : vector<8x96xf32> to vector<8x32xf32>
    %323 = arith.mulf %321, %280 : vector<8x32xf32>
    %324 = arith.mulf %320, %319 : vector<8x32xf32>
    %325 = arith.addf %323, %324 : vector<8x32xf32>
    %326 = math.tanh %325 : vector<8x32xf32>
    %327 = arith.mulf %322, %326 : vector<8x32xf32>
    %c6_80 = arith.constant 6 : index
    %c0_81 = arith.constant 0 : index
    %c0_82 = arith.constant 0 : index
    %328 = vector.load %arg10[%c6_80, %c0_81, %c0_82] : memref<8x8x32xf32, #tpu.memory_space<vmem>>, vector<1x8x32xf32>
    %329 = vector.shape_cast %328 : vector<1x8x32xf32> to vector<8x32xf32>
    %330 = vector.shape_cast %327 : vector<8x32xf32> to vector<1x8x32xf32>
    tpu.vector_store %arg10[%c6_80, %c0_81, %c0_82], %330 {strides = array<i32>} : memref<8x8x32xf32, #tpu.memory_space<vmem>>, vector<1x8x32xf32>,
    %c7 = arith.constant 7 : index
    %c0_83 = arith.constant 0 : index
    %c0_84 = arith.constant 0 : index
    %331 = vector.load %arg9[%c7, %c0_83, %c0_84] : memref<8x8x128xf32, #tpu.memory_space<vmem>>, vector<1x8x128xf32>
    %332 = vector.shape_cast %331 : vector<1x8x128xf32> to vector<8x128xf32>
    %333 = arith.truncf %306 : vector<8x32xf32> to vector<8x32xbf16>
    %cst_85 = arith.constant dense<0.000000e+00> : vector<8x128xf32>
    %334 = tpu.matmul %333, %1, %cst_85 {dimension_numbers = #tpu.dot_dimension_numbers<[1], [0], [0], [1], [0, 0, 1, 1], [], []>} : vector<8x32xbf16>, vector<32x128xbf16>, vector<8x128xf32> -> vector<8x128xf32>
    %335 = arith.addf %332, %334 : vector<8x128xf32>
    %336 = vector.extract_strided_slice %335 {offsets = [0, 0], sizes = [8, 96], strides = [1, 1]} : vector<8x128xf32> to vector<8x96xf32>
    %337 = arith.negf %336 : vector<8x96xf32>
    %338 = math.exp %337 : vector<8x96xf32>
    %cst_86 = arith.constant 1.000000e+00 : f32
    %339 = vector.broadcast %cst_86 : f32 to vector<8x96xf32>
    %340 = arith.addf %339, %338 : vector<8x96xf32>
    %341 = arith.divf %339, %340 : vector<8x96xf32>
    %342 = vector.extract_strided_slice %335 {offsets = [0, 96], sizes = [8, 32], strides = [1, 1]} : vector<8x128xf32> to vector<8x32xf32>
    %343 = math.tanh %342 : vector<8x32xf32>
    %344 = vector.extract_strided_slice %341 {offsets = [0, 0], sizes = [8, 32], strides = [1, 1]} : vector<8x96xf32> to vector<8x32xf32>
    %345 = vector.extract_strided_slice %341 {offsets = [0, 32], sizes = [8, 32], strides = [1, 1]} : vector<8x96xf32> to vector<8x32xf32>
    %346 = vector.extract_strided_slice %341 {offsets = [0, 64], sizes = [8, 32], strides = [1, 1]} : vector<8x96xf32> to vector<8x32xf32>
    %347 = arith.mulf %345, %304 : vector<8x32xf32>
    %348 = arith.mulf %344, %343 : vector<8x32xf32>
    %349 = arith.addf %347, %348 : vector<8x32xf32>
    %350 = math.tanh %349 : vector<8x32xf32>
    %351 = arith.mulf %346, %350 : vector<8x32xf32>
    %352 = tpu.concatenate %351, %327 in 1 : vector<8x32xf32>, vector<8x32xf32> -> vector<8x64xf32>
    %353 = arith.truncf %352 : vector<8x64xf32> to vector<8x64xbf16>
    %cst_87 = arith.constant dense<0.000000e+00> : vector<8x128xf32>
    %354 = tpu.matmul %353, %3, %cst_87 {dimension_numbers = #tpu.dot_dimension_numbers<[1], [0], [0], [1], [0, 0, 1, 1], [], []>} : vector<8x64xbf16>, vector<64x128xbf16>, vector<8x128xf32> -> vector<8x128xf32>
    %355 = vector.broadcast %4 : vector<1x128xf32> to vector<8x128xf32>
    %356 = arith.addf %354, %355 : vector<8x128xf32>
    %357 = vector.extract_strided_slice %356 {offsets = [0, 0], sizes = [8, 96], strides = [1, 1]} : vector<8x128xf32> to vector<8x96xf32>
    %358 = arith.negf %357 : vector<8x96xf32>
    %359 = math.exp %358 : vector<8x96xf32>
    %cst_88 = arith.constant 1.000000e+00 : f32
    %360 = vector.broadcast %cst_88 : f32 to vector<8x96xf32>
    %361 = arith.addf %360, %359 : vector<8x96xf32>
    %362 = arith.divf %360, %361 : vector<8x96xf32>
    %363 = vector.extract_strided_slice %356 {offsets = [0, 96], sizes = [8, 32], strides = [1, 1]} : vector<8x128xf32> to vector<8x32xf32>
    %364 = math.tanh %363 : vector<8x32xf32>
    %365 = vector.extract_strided_slice %362 {offsets = [0, 0], sizes = [8, 32], strides = [1, 1]} : vector<8x96xf32> to vector<8x32xf32>
    %366 = vector.extract_strided_slice %362 {offsets = [0, 32], sizes = [8, 32], strides = [1, 1]} : vector<8x96xf32> to vector<8x32xf32>
    %367 = vector.extract_strided_slice %362 {offsets = [0, 64], sizes = [8, 32], strides = [1, 1]} : vector<8x96xf32> to vector<8x32xf32>
    %368 = arith.mulf %366, %325 : vector<8x32xf32>
    %369 = arith.mulf %365, %364 : vector<8x32xf32>
    %370 = arith.addf %368, %369 : vector<8x32xf32>
    %371 = math.tanh %370 : vector<8x32xf32>
    %372 = arith.mulf %367, %371 : vector<8x32xf32>
    %c7_89 = arith.constant 7 : index
    %c0_90 = arith.constant 0 : index
    %c0_91 = arith.constant 0 : index
    %373 = vector.load %arg10[%c7_89, %c0_90, %c0_91] : memref<8x8x32xf32, #tpu.memory_space<vmem>>, vector<1x8x32xf32>
    %374 = vector.shape_cast %373 : vector<1x8x32xf32> to vector<8x32xf32>
    %375 = vector.shape_cast %372 : vector<8x32xf32> to vector<1x8x32xf32>
    tpu.vector_store %arg10[%c7_89, %c0_90, %c0_91], %375 {strides = array<i32>} : memref<8x8x32xf32, #tpu.memory_space<vmem>>, vector<1x8x32xf32>,
    %c0_92 = arith.constant 0 : index
    %c0_93 = arith.constant 0 : index
    %c0_94 = arith.constant 0 : index
    %376 = vector.load %arg10[%c0_92, %c0_93, %c0_94] : memref<8x8x32xf32, #tpu.memory_space<vmem>>, vector<8x8x32xf32>
    %377 = vector.shape_cast %376 : vector<8x8x32xf32> to vector<64x32xf32>
    %378 = arith.truncf %377 : vector<64x32xf32> to vector<64x32xbf16>
    %c0_95 = arith.constant 0 : index
    %c0_96 = arith.constant 0 : index
    %379 = vector.load %arg6[%c0_95, %c0_96] : memref<32x8xbf16, #tpu.memory_space<vmem>>, vector<32x8xbf16>
    %cst_97 = arith.constant dense<0.000000e+00> : vector<64x8xf32>
    %380 = tpu.matmul %378, %379, %cst_97 {dimension_numbers = #tpu.dot_dimension_numbers<[1], [0], [0], [1], [0, 0, 1, 1], [], []>} : vector<64x32xbf16>, vector<32x8xbf16>, vector<64x8xf32> -> vector<64x8xf32>
    %c0_98 = arith.constant 0 : index
    %c0_99 = arith.constant 0 : index
    %381 = vector.load %arg7[%c0_98, %c0_99] : memref<1x8xf32, #tpu.memory_space<vmem>>, vector<1x8xf32>
    %382 = vector.broadcast %381 : vector<1x8xf32> to vector<64x8xf32>
    %383 = arith.addf %380, %382 : vector<64x8xf32>
    %384 = vector.shape_cast %383 : vector<64x8xf32> to vector<8x8x8xf32>
    %c0_100 = arith.constant 0 : index
    %c0_101 = arith.constant 0 : index
    %c0_102 = arith.constant 0 : index
    %385 = vector.load %arg8[%c0_100, %c0_101, %c0_102] : memref<8x8x8xf32, #tpu.memory_space<vmem>>, vector<8x8x8xf32>
    tpu.vector_store %arg8[%c0_100, %c0_101, %c0_102], %384 {strides = array<i32>} : memref<8x8x8xf32, #tpu.memory_space<vmem>>, vector<8x8x8xf32>,
    return
  }
}

</mosaic_0001>

<llo_original>
// kernel: tpu_custom_call.1
$region0: #{tpu_custom_call.1}
  #allocation0 [shape = 'u32[]', space=smem, size = 0x4, offset = 0x4, fixed_abs, tag = 'smem constant byte address 0x4 - core index']
  #allocation1 [shape = 'u32[144,128]{1,0:T(1,128)}', space=vmem, size = 0x12000, scoped, tag = 'internal scratch']
  #allocation2 [shape = 'f32[8,8,128]{2,1,0:T(8,128)}', space=vmem, size = 0x8000, scoped, tag = 'scratch operand']
  #allocation3 [shape = 'f32[8,8,32]{2,1,0:T(8,128)}', space=vmem, size = 0x8000, scoped, tag = 'scratch operand']
  %s0 = inlined_call_operand.hbm [shape: bf16[8,8,16], index: 0, kind: input, shape index: {}]
  %s1 = inlined_call_operand.hbm [shape: bf16[16,128], index: 1, kind: input, shape index: {}]
  %s2 = inlined_call_operand.vmem [shape: bf16[32,128], index: 2, kind: input, shape index: {}]
  %s3 = inlined_call_operand.vmem [shape: f32[1,128], index: 3, kind: input, shape index: {}]
  %s4 = inlined_call_operand.hbm [shape: bf16[64,128], index: 4, kind: input, shape index: {}]
  %s5 = inlined_call_operand.vmem [shape: f32[1,128], index: 5, kind: input, shape index: {}]
  %s6 = inlined_call_operand.vmem [shape: bf16[32,8], index: 6, kind: input, shape index: {}]
  %s7 = inlined_call_operand.vmem [shape: f32[1,8], index: 7, kind: input, shape index: {}]
  %s8 = inlined_call_operand.hbm [shape: f32[8,8,8], index: 8, kind: output, shape index: {}]
  %s9 = sld [smem:[#allocation0]]
  $region54: #{tpu_custom_call.1} parent=0
    _
  %s11 = ssub.s32 1, %s9
  %s12 = scalar_select 0, %s11, %s9
  $region1: #{tpu_custom_call.1} parent=0
    #allocation4 [shape = 'u8[16384]{0}', space=vmem, size = 0x4000, scoped, tag = 'input window, operand 0, single buffered']
    #allocation5 [shape = 's32[1]{0}', space=sflag, size = 0x4, scoped, tag = 'scoped memory for tpu_custom_call.1']
    #allocation6 [shape = 's32[1]{0}', space=sflag, size = 0x4, scoped, tag = 'scoped memory for tpu_custom_call.1']
    #allocation7 [shape = 'u8[4096]{0}', space=vmem, size = 0x1000, scoped, tag = 'input window, operand 1, single buffered']
    #allocation8 [shape = 's32[1]{0}', space=sflag, size = 0x4, scoped, tag = 'scoped memory for tpu_custom_call.1']
    #allocation9 [shape = 'u8[16384]{0}', space=vmem, size = 0x4000, scoped, tag = 'input window, operand 4, single buffered']
    #allocation10 [shape = 'u8[32768]{0}', space=vmem, size = 0x8000, scoped, tag = 'output window, operand 0, single buffered']
    %13 = vsyncpa [#allocation5], 0
    %14 = vsyncpa [#allocation8], 0
    %15 = vsyncpa [#allocation6], 0
    // Predicated region
    $region2: #{tpu_custom_call.1} parent=1 // pred_check
      _
    $region3: #{tpu_custom_call.1} parent=1 // pred_check_branch
      %17 = sbr.rel (0) target = $region5
    $region4: #{tpu_custom_call.1} parent=1 // pred_region
      %s19 = ssub.s32 512, 512
      %20 = vsyncadd [#allocation5], %s19
      %s21 = sshll.u32 [#allocation4], 4
      %s22 = int_to_ptr.vmem [resolvable:$true] %s21
      %27 = dma.hbm_to_vmem [thread:$0]  %s0, 512, %s22, [#allocation5], 64, 64, 4
    $region5: #{tpu_custom_call.1} parent=1 // pred_fallthru
      _
    // Predicated region
    $region6: #{tpu_custom_call.1} parent=1 // pred_check
      _
    $region7: #{tpu_custom_call.1} parent=1 // pred_check_branch
      %29 = sbr.rel (0) target = $region9
    $region8: #{tpu_custom_call.1} parent=1 // pred_region
      %s31 = ssub.s32 128, 128
      %32 = vsyncadd [#allocation8], %s31
      %s33 = sshll.u32 [#allocation7], 4
      %s34 = int_to_ptr.vmem [resolvable:$true] %s33
      %39 = dma.hbm_to_vmem [thread:$0]  %s1, 128, %s34, [#allocation8], 64, 64, 4
    $region9: #{tpu_custom_call.1} parent=1 // pred_fallthru
      _
    // Predicated region
    $region10: #{tpu_custom_call.1} parent=1 // pred_check
      _
    $region11: #{tpu_custom_call.1} parent=1 // pred_check_branch
      %41 = sbr.rel (0) target = $region13
    $region12: #{tpu_custom_call.1} parent=1 // pred_region
      _
    $region13: #{tpu_custom_call.1} parent=1 // pred_fallthru
      _
    // Predicated region
    $region14: #{tpu_custom_call.1} parent=1 // pred_check
      _
    $region15: #{tpu_custom_call.1} parent=1 // pred_check_branch
      %43 = sbr.rel (0) target = $region17
    $region16: #{tpu_custom_call.1} parent=1 // pred_region
      _
    $region17: #{tpu_custom_call.1} parent=1 // pred_fallthru
      _
    // Predicated region
    $region18: #{tpu_custom_call.1} parent=1 // pred_check
      _
    $region19: #{tpu_custom_call.1} parent=1 // pred_check_branch
      %45 = sbr.rel (0) target = $region21
    $region20: #{tpu_custom_call.1} parent=1 // pred_region
      %s47 = ssub.s32 512, 512
      %48 = vsyncadd [#allocation8], %s47
      %s49 = sshll.u32 [#allocation9], 4
      %s50 = int_to_ptr.vmem [resolvable:$true] %s49
      %55 = dma.hbm_to_vmem [thread:$0]  %s4, 512, %s50, [#allocation8], 64, 64, 4
    $region21: #{tpu_custom_call.1} parent=1 // pred_fallthru
      _
    // Predicated region
    $region22: #{tpu_custom_call.1} parent=1 // pred_check
      _
    $region23: #{tpu_custom_call.1} parent=1 // pred_check_branch
      %57 = sbr.rel (0) target = $region25
    $region24: #{tpu_custom_call.1} parent=1 // pred_region
      _
    $region25: #{tpu_custom_call.1} parent=1 // pred_fallthru
      _
    // Predicated region
    $region26: #{tpu_custom_call.1} parent=1 // pred_check
      _
    $region27: #{tpu_custom_call.1} parent=1 // pred_check_branch
      %59 = sbr.rel (0) target = $region29
    $region28: #{tpu_custom_call.1} parent=1 // pred_region
      _
    $region29: #{tpu_custom_call.1} parent=1 // pred_fallthru
      _
    // Predicated region
    $region30: #{tpu_custom_call.1} parent=1 // pred_check
      _
    $region31: #{tpu_custom_call.1} parent=1 // pred_check_branch
      %61 = sbr.rel (0) target = $region33
    $region32: #{tpu_custom_call.1} parent=1 // pred_region
      _
    $region33: #{tpu_custom_call.1} parent=1 // pred_fallthru
      _
    // Predicated region
    $region34: #{tpu_custom_call.1} parent=1 // pred_check
      _
    $region35: #{tpu_custom_call.1} parent=1 // pred_check_branch
      %63 = sbr.rel (0) target = $region37
    $region36: #{tpu_custom_call.1} parent=1 // pred_region
      %64 = dma.done [#allocation5], 512
    $region37: #{tpu_custom_call.1} parent=1 // pred_fallthru
      _
    // Predicated region
    $region38: #{tpu_custom_call.1} parent=1 // pred_check
      _
    $region39: #{tpu_custom_call.1} parent=1 // pred_check_branch
      %66 = sbr.rel (0) target = $region41
    $region40: #{tpu_custom_call.1} parent=1 // pred_region
      %67 = dma.done [#allocation8], 128
    $region41: #{tpu_custom_call.1} parent=1 // pred_fallthru
      _
    // Predicated region
    $region42: #{tpu_custom_call.1} parent=1 // pred_check
      _
    $region43: #{tpu_custom_call.1} parent=1 // pred_check_branch
      %69 = sbr.rel (0) target = $region45
    $region44: #{tpu_custom_call.1} parent=1 // pred_region
      %70 = dma.done [#allocation8], 512
    $region45: #{tpu_custom_call.1} parent=1 // pred_fallthru
      _
    %v72 = vld [vmem:[#allocation7] sm:$0xf]
    %v73 = vld [vmem:[#allocation7 + $0x4] sm:$0xf]
    %v74 = vld [vmem:[%s2] sm:$0xf]
    %v75 = vld [vmem:[%s2 + $0x4] sm:$0xf]
    %v76 = vld [vmem:[%s2 + $0x8] sm:$0xf]
    %v77 = vld [vmem:[%s2 + $0xc] sm:$0xf]
    %v78 = vld [vmem:[%s3] sm:$0x1]
    %v79 = vld [vmem:[#allocation9] sm:$0xf]
    %v80 = vld [vmem:[#allocation9 + $0x4] sm:$0xf]
    %v81 = vld [vmem:[#allocation9 + $0x8] sm:$0xf]
    %v82 = vld [vmem:[#allocation9 + $0xc] sm:$0xf]
    %v83 = vld [vmem:[#allocation9 + $0x10] sm:$0xf]
    %v84 = vld [vmem:[#allocation9 + $0x14] sm:$0xf]
    %v85 = vld [vmem:[#allocation9 + $0x18] sm:$0xf]
    %v86 = vld [vmem:[#allocation9 + $0x1c] sm:$0xf]
    %v87 = vld [vmem:[%s5] sm:$0x1]
    %v88 = vld [vmem:[#allocation4] sm:$0xf]
    %v89 = vld [vmem:[#allocation4 + $0x4] sm:$0xf]
    %v90 = vld [vmem:[#allocation4 + $0x8] sm:$0xf]
    %v91 = vld [vmem:[#allocation4 + $0xc] sm:$0xf]
    %v92 = vld [vmem:[#allocation4 + $0x10] sm:$0xf]
    %v93 = vld [vmem:[#allocation4 + $0x14] sm:$0xf]
    %v94 = vld [vmem:[#allocation4 + $0x18] sm:$0xf]
    %v95 = vld [vmem:[#allocation4 + $0x1c] sm:$0xf]
    %v97 = vlaneseq
    %v98 = vshrl.u32 %v97, 7
    %v99 = vsub.s32 0, %v98
    %v100 = vrot.slane %v78, %v99
    %v110 = vunpack.c.l.b16 %v88
    %v111 = vunpack.c.l.b16 %v89
    %v112 = vunpack.c.l.b16 %v90
    %v113 = vunpack.c.l.b16 %v91
    %v114 = vunpack.c.l.b16 %v92
    %v115 = vunpack.c.l.b16 %v93
    %v116 = vunpack.c.l.b16 %v94
    %v117 = vunpack.c.l.b16 %v95
    %v118 = vpack.c.b16 %v111, %v110
    %v119 = vpack.c.b16 %v113, %v112
    %v120 = vpack.c.b16 %v115, %v114
    %v121 = vpack.c.b16 %v117, %v116
    %v124 = vunpack.c.l.b16 %v72
    %v125 = vunpack.c.l.b16 %v73
    %v126 = vpack.c.b16 %v125, %v124
    %vm128 = vcmask 130048
    %v130 = vsel %vm128, %v118, 0
    %v133 = vsel %vm128, %v119, 0
    %v136 = vsel %vm128, %v120, 0
    %v139 = vsel %vm128, %v121, 0
    %141 = vmatprep.subr.bf16.mxu0 0
    %142 = vmatpush1.bf16.msra.mxu0 0
    %143 = vmatprep.subr.bf16.mxu0 0
    %144 = vmatpush1.bf16.msra.mxu0 0
    %145 = vmatprep.subr.bf16.mxu0 0
    %146 = vmatpush1.bf16.msra.mxu0 0
    %147 = vmatprep.subr.bf16.mxu0 0
    %148 = vmatpush1.bf16.msra.mxu0 0
    %149 = vmatprep.subr.bf16.mxu0 0
    %150 = vmatpush1.bf16.msra.mxu0 0
    %151 = vmatprep.subr.bf16.mxu0 0
    %152 = vmatpush1.bf16.msra.mxu0 0
    %153 = vmatprep.subr.bf16.mxu0 0
    %154 = vmatpush1.bf16.msra.mxu0 0
    %155 = vmatprep.subr.bf16.mxu0 0
    %156 = vmatpush1.bf16.msra.mxu0 %v126
    %157 = vmatprep.subr.bf16.mxu0 0
    %158 = vmatpush2.bf16.msra.mxu0 0
    %159 = vmatprep.subr.bf16.mxu0 0
    %160 = vmatpush2.bf16.msra.mxu0 0
    %161 = vmatprep.subr.bf16.mxu0 0
    %162 = vmatpush2.bf16.msra.mxu0 0
    %163 = vmatprep.subr.bf16.mxu0 0
    %164 = vmatpush2.bf16.msra.mxu0 0
    %165 = vmatprep.subr.bf16.mxu0 0
    %166 = vmatpush2.bf16.msra.mxu0 0
    %167 = vmatprep.subr.bf16.mxu0 0
    %168 = vmatpush2.bf16.msra.mxu0 0
    %169 = vmatprep.subr.bf16.mxu0 0
    %170 = vmatpush2.bf16.msra.mxu0 0
    %171 = vmatprep.subr.bf16.mxu0 0
    %172 = vmatpush2.bf16.msra.mxu0 0
    %173 = vmatprep.mubr.bf16.mxu0 0
    %174 = vmatmul.mubr.bf16.gmra.mxu0 %v130
    %v175 = vpop.f32.mrf.mxu0
    %v176 = vadd.f32 %v100, %v175
    %v177 = vpop.f32.mrf.mxu0
    %v178 = vpop.f32.mrf.mxu0
    %v179 = vadd.f32 %v100, %v178
    %v180 = vpop.f32.mrf.mxu0
    %181 = vmatprep.mubr.bf16.mxu0 0
    %182 = vmatmul.mubr.bf16.gmra.mxu0 %v133
    %v183 = vpop.f32.mrf.mxu0
    %v184 = vadd.f32 %v100, %v183
    %v185 = vpop.f32.mrf.mxu0
    %v186 = vpop.f32.mrf.mxu0
    %v187 = vadd.f32 %v100, %v186
    %v188 = vpop.f32.mrf.mxu0
    %189 = vmatprep.mubr.bf16.mxu0 0
    %190 = vmatmul.mubr.bf16.gmra.mxu0 %v136
    %v191 = vpop.f32.mrf.mxu0
    %v192 = vadd.f32 %v100, %v191
    %v193 = vpop.f32.mrf.mxu0
    %v194 = vpop.f32.mrf.mxu0
    %v195 = vadd.f32 %v100, %v194
    %v196 = vpop.f32.mrf.mxu0
    %197 = vmatprep.mubr.bf16.mxu0 0
    %198 = vmatmul.mubr.bf16.gmra.mxu0 %v139
    %v199 = vpop.f32.mrf.mxu0
    %v200 = vadd.f32 %v100, %v199
    %v201 = vpop.f32.mrf.mxu0
    %v202 = vpop.f32.mrf.mxu0
    %v203 = vadd.f32 %v100, %v202
    %v204 = vpop.f32.mrf.mxu0
    %205 = vdwg.mxu0
    %206 = vst [vmem:[#allocation2] sm:$0xff] %v176
    %207 = vst [vmem:[#allocation2 + $0x8] sm:$0xff] %v179
    %208 = vst [vmem:[#allocation2 + $0x10] sm:$0xff] %v184
    %209 = vst [vmem:[#allocation2 + $0x18] sm:$0xff] %v187
    %210 = vst [vmem:[#allocation2 + $0x20] sm:$0xff] %v192
    %211 = vst [vmem:[#allocation2 + $0x28] sm:$0xff] %v195
    %212 = vst [vmem:[#allocation2 + $0x30] sm:$0xff] %v200
    %213 = vst [vmem:[#allocation2 + $0x38] sm:$0xff] %v203
    %v214 = vld [vmem:[#allocation2] sm:$0xff]
    %v219 = vunpack.c.l.b16 %v74
    %v220 = vunpack.c.l.b16 %v75
    %v221 = vunpack.c.l.b16 %v76
    %v222 = vunpack.c.l.b16 %v77
    %v223 = vpack.c.b16 %v220, %v219
    %v224 = vpack.c.b16 %v222, %v221
    %vm227 = vcmask 261120
    %v229 = vsel %vm227, 0, 0
    %231 = vmatprep.subr.bf16.mxu0 0
    %232 = vmatpush1.bf16.msra.mxu0 0
    %233 = vmatprep.subr.bf16.mxu0 0
    %234 = vmatpush1.bf16.msra.mxu0 0
    %235 = vmatprep.subr.bf16.mxu0 0
    %236 = vmatpush1.bf16.msra.mxu0 0
    %237 = vmatprep.subr.bf16.mxu0 0
    %238 = vmatpush1.bf16.msra.mxu0 0
    %239 = vmatprep.subr.bf16.mxu0 0
    %240 = vmatpush1.bf16.msra.mxu0 0
    %241 = vmatprep.subr.bf16.mxu0 0
    %242 = vmatpush1.bf16.msra.mxu0 0
    %243 = vmatprep.subr.bf16.mxu0 0
    %244 = vmatpush1.bf16.msra.mxu0 %v224
    %245 = vmatprep.subr.bf16.mxu0 0
    %246 = vmatpush1.bf16.msra.mxu0 %v223
    %247 = vmatprep.subr.bf16.mxu0 0
    %248 = vmatpush2.bf16.msra.mxu0 0
    %249 = vmatprep.subr.bf16.mxu0 0
    %250 = vmatpush2.bf16.msra.mxu0 0
    %251 = vmatprep.subr.bf16.mxu0 0
    %252 = vmatpush2.bf16.msra.mxu0 0
    %253 = vmatprep.subr.bf16.mxu0 0
    %254 = vmatpush2.bf16.msra.mxu0 0
    %255 = vmatprep.subr.bf16.mxu0 0
    %256 = vmatpush2.bf16.msra.mxu0 0
    %257 = vmatprep.subr.bf16.mxu0 0
    %258 = vmatpush2.bf16.msra.mxu0 0
    %259 = vmatprep.subr.bf16.mxu0 0
    %260 = vmatpush2.bf16.msra.mxu0 0
    %261 = vmatprep.subr.bf16.mxu0 0
    %262 = vmatpush2.bf16.msra.mxu0 0
    %263 = vmatprep.mubr.bf16.mxu0 0
    %264 = vmatmul.mubr.bf16.gmra.mxu0 %v229
    %v265 = vpop.f32.mrf.mxu0
    %v266 = vadd.f32 0.0, %v265
    %v267 = vpop.f32.mrf.mxu0
    %v268 = vpop.f32.mrf.mxu0
    %v269 = vpop.f32.mrf.mxu0
    %270 = vdwg.mxu0
    %v271 = vadd.f32 %v214, %v266
    %v272 = vxor.u32 %v271, 2147483648
    %v273 = vmul.f32 %v272, 1.442695
    %v274 = vpow.pop %v273
    %v275 = vadd.f32 %v274, 1.0
    %v276 = vrcp.pop %v275
    %v277 = vmul.f32 1.0, %v276
    %v278 = vtanh.pop %v271
    %v279 = vmul.f32 %v277, 0.0
    %281 = vrot.lane.b32.xlu0 %v278, 32
    %v282 = vpop.permute.xlu0 %281
    %v284 = vmul.f32 %v277, %v282
    %286 = vrot.lane.b32.xlu0 %v284, 32
    %v287 = vpop.permute.xlu0 %286
    %v289 = vadd.f32 %v279, %v287
    %v290 = vtanh.pop %v289
    %292 = vrot.lane.b32.xlu0 %v290, 32
    %v293 = vpop.permute.xlu0 %292
    %v295 = vmul.f32 %v277, %v293
    %297 = vrot.lane.b32.xlu0 %v295, 64
    %v298 = vpop.permute.xlu0 %297
    %v300 = vsel %vm227, %v298, 0.0
    %v301 = vpack.c.bf16 %v300, %v300
    %v303 = vlaneseq
    %v304 = vshrl.u32 %v303, 7
    %v305 = vsub.s32 0, %v304
    %v306 = vrot.slane %v87, %v305
    %v316 = vunpack.c.l.b16 %v79
    %v317 = vunpack.c.l.b16 %v80
    %v318 = vunpack.c.l.b16 %v81
    %v319 = vunpack.c.l.b16 %v82
    %v320 = vunpack.c.l.b16 %v83
    %v321 = vunpack.c.l.b16 %v84
    %v322 = vunpack.c.l.b16 %v85
    %v323 = vunpack.c.l.b16 %v86
    %v324 = vpack.c.b16 %v317, %v316
    %v325 = vpack.c.b16 %v319, %v318
    %v326 = vpack.c.b16 %v321, %v320
    %v327 = vpack.c.b16 %v323, %v322
    %vm332 = vcmask 523264
    %v334 = vsel %vm332, %v301, 0
    %336 = vmatprep.subr.bf16.mxu0 0
    %337 = vmatpush1.bf16.msra.mxu0 0
    %338 = vmatprep.subr.bf16.mxu0 0
    %339 = vmatpush1.bf16.msra.mxu0 0
    %340 = vmatprep.subr.bf16.mxu0 0
    %341 = vmatpush1.bf16.msra.mxu0 0
    %342 = vmatprep.subr.bf16.mxu0 0
    %343 = vmatpush1.bf16.msra.mxu0 0
    %344 = vmatprep.subr.bf16.mxu0 0
    %345 = vmatpush1.bf16.msra.mxu0 %v327
    %346 = vmatprep.subr.bf16.mxu0 0
    %347 = vmatpush1.bf16.msra.mxu0 %v326
    %348 = vmatprep.subr.bf16.mxu0 0
    %349 = vmatpush1.bf16.msra.mxu0 %v325
    %350 = vmatprep.subr.bf16.mxu0 0
    %351 = vmatpush1.bf16.msra.mxu0 %v324
    %352 = vmatprep.subr.bf16.mxu0 0
    %353 = vmatpush2.bf16.msra.mxu0 0
    %354 = vmatprep.subr.bf16.mxu0 0
    %355 = vmatpush2.bf16.msra.mxu0 0
    %356 = vmatprep.subr.bf16.mxu0 0
    %357 = vmatpush2.bf16.msra.mxu0 0
    %358 = vmatprep.subr.bf16.mxu0 0
    %359 = vmatpush2.bf16.msra.mxu0 0
    %360 = vmatprep.subr.bf16.mxu0 0
    %361 = vmatpush2.bf16.msra.mxu0 0
    %362 = vmatprep.subr.bf16.mxu0 0
    %363 = vmatpush2.bf16.msra.mxu0 0
    %364 = vmatprep.subr.bf16.mxu0 0
    %365 = vmatpush2.bf16.msra.mxu0 0
    %366 = vmatprep.subr.bf16.mxu0 0
    %367 = vmatpush2.bf16.msra.mxu0 0
    %368 = vmatprep.mubr.bf16.mxu0 0
    %369 = vmatmul.mubr.bf16.gmra.mxu0 %v334
    %v370 = vpop.f32.mrf.mxu0
    %v371 = vadd.f32 %v306, %v370
    %v372 = vpop.f32.mrf.mxu0
    %v373 = vpop.f32.mrf.mxu0
    %v374 = vpop.f32.mrf.mxu0
    %375 = vdwg.mxu0
    %v376 = vxor.u32 %v371, 2147483648
    %v377 = vmul.f32 %v376, 1.442695
    %v378 = vpow.pop %v377
    %v379 = vadd.f32 %v378, 1.0
    %v380 = vrcp.pop %v379
    %v381 = vmul.f32 1.0, %v380
    %v382 = vtanh.pop %v371
    %v383 = vmul.f32 %v381, 0.0
    %385 = vrot.lane.b32.xlu0 %v382, 32
    %v386 = vpop.permute.xlu0 %385
    %v388 = vmul.f32 %v381, %v386
    %390 = vrot.lane.b32.xlu0 %v388, 32
    %v391 = vpop.permute.xlu0 %390
    %v393 = vadd.f32 %v383, %v391
    %v394 = vtanh.pop %v393
    %396 = vrot.lane.b32.xlu0 %v394, 32
    %v397 = vpop.permute.xlu0 %396
    %v399 = vmul.f32 %v381, %v397
    %401 = vrot.lane.b32.xlu0 %v399, 64
    %v402 = vpop.permute.xlu0 %401
    %404 = vst.msk [vmem:[#allocation3] sm:$0xff] %vm227, %v402
    %s405 = scalar_lea.vmem [#allocation2], 8
    %v406 = vld [vmem:[%s405] sm:$0xff]
    %v407 = vpack.c.bf16 %v295, %v295
    %409 = vrot.lane.b32.xlu0 %v407, 64
    %v410 = vpop.permute.xlu0 %409
    %v412 = vsel %vm227, %v410, 0
    %414 = vmatprep.subr.bf16.mxu0 0
    %415 = vmatpush1.bf16.msra.mxu0 0
    %416 = vmatprep.subr.bf16.mxu0 0
    %417 = vmatpush1.bf16.msra.mxu0 0
    %418 = vmatprep.subr.bf16.mxu0 0
    %419 = vmatpush1.bf16.msra.mxu0 0
    %420 = vmatprep.subr.bf16.mxu0 0
    %421 = vmatpush1.bf16.msra.mxu0 0
    %422 = vmatprep.subr.bf16.mxu0 0
    %423 = vmatpush1.bf16.msra.mxu0 0
    %424 = vmatprep.subr.bf16.mxu0 0
    %425 = vmatpush1.bf16.msra.mxu0 0
    %426 = vmatprep.subr.bf16.mxu0 0
    %427 = vmatpush1.bf16.msra.mxu0 %v224
    %428 = vmatprep.subr.bf16.mxu0 0
    %429 = vmatpush1.bf16.msra.mxu0 %v223
    %430 = vmatprep.subr.bf16.mxu0 0
    %431 = vmatpush2.bf16.msra.mxu0 0
    %432 = vmatprep.subr.bf16.mxu0 0
    %433 = vmatpush2.bf16.msra.mxu0 0
    %434 = vmatprep.subr.bf16.mxu0 0
    %435 = vmatpush2.bf16.msra.mxu0 0
    %436 = vmatprep.subr.bf16.mxu0 0
    %437 = vmatpush2.bf16.msra.mxu0 0
    %438 = vmatprep.subr.bf16.mxu0 0
    %439 = vmatpush2.bf16.msra.mxu0 0
    %440 = vmatprep.subr.bf16.mxu0 0
    %441 = vmatpush2.bf16.msra.mxu0 0
    %442 = vmatprep.subr.bf16.mxu0 0
    %443 = vmatpush2.bf16.msra.mxu0 0
    %444 = vmatprep.subr.bf16.mxu0 0
    %445 = vmatpush2.bf16.msra.mxu0 0
    %446 = vmatprep.mubr.bf16.mxu0 0
    %447 = vmatmul.mubr.bf16.gmra.mxu0 %v412
    %v448 = vpop.f32.mrf.mxu0
    %v449 = vadd.f32 0.0, %v448
    %v450 = vpop.f32.mrf.mxu0
    %v451 = vpop.f32.mrf.mxu0
    %v452 = vpop.f32.mrf.mxu0
    %453 = vdwg.mxu0
    %v454 = vadd.f32 %v406, %v449
    %v455 = vxor.u32 %v454, 2147483648
    %v456 = vmul.f32 %v455, 1.442695
    %v457 = vpow.pop %v456
    %v458 = vadd.f32 %v457, 1.0
    %v459 = vrcp.pop %v458
    %v460 = vmul.f32 1.0, %v459
    %v461 = vtanh.pop %v454
    %v462 = vmul.f32 %v460, %v289
    %464 = vrot.lane.b32.xlu0 %v461, 32
    %v465 = vpop.permute.xlu0 %464
    %v467 = vmul.f32 %v460, %v465
    %469 = vrot.lane.b32.xlu0 %v467, 32
    %v470 = vpop.permute.xlu0 %469
    %v472 = vadd.f32 %v462, %v470
    %v473 = vtanh.pop %v472
    %475 = vrot.lane.b32.xlu0 %v473, 32
    %v476 = vpop.permute.xlu0 %475
    %v478 = vmul.f32 %v460, %v476
    %480 = vrot.lane.b32.xlu0 %v478, 64
    %v481 = vpop.permute.xlu0 %480
    %483 = vrot.lane.b32.xlu0 %v399, 96
    %v484 = vpop.permute.xlu0 %483
    %v486 = vsel %vm227, %v481, %v484
    %v487 = vpack.c.bf16 %v486, %v486
    %v489 = vsel %vm332, %v487, 0
    %491 = vmatprep.subr.bf16.mxu0 0
    %492 = vmatpush1.bf16.msra.mxu0 0
    %493 = vmatprep.subr.bf16.mxu0 0
    %494 = vmatpush1.bf16.msra.mxu0 0
    %495 = vmatprep.subr.bf16.mxu0 0
    %496 = vmatpush1.bf16.msra.mxu0 0
    %497 = vmatprep.subr.bf16.mxu0 0
    %498 = vmatpush1.bf16.msra.mxu0 0
    %499 = vmatprep.subr.bf16.mxu0 0
    %500 = vmatpush1.bf16.msra.mxu0 %v327
    %501 = vmatprep.subr.bf16.mxu0 0
    %502 = vmatpush1.bf16.msra.mxu0 %v326
    %503 = vmatprep.subr.bf16.mxu0 0
    %504 = vmatpush1.bf16.msra.mxu0 %v325
    %505 = vmatprep.subr.bf16.mxu0 0
    %506 = vmatpush1.bf16.msra.mxu0 %v324
    %507 = vmatprep.subr.bf16.mxu0 0
    %508 = vmatpush2.bf16.msra.mxu0 0
    %509 = vmatprep.subr.bf16.mxu0 0
    %510 = vmatpush2.bf16.msra.mxu0 0
    %511 = vmatprep.subr.bf16.mxu0 0
    %512 = vmatpush2.bf16.msra.mxu0 0
    %513 = vmatprep.subr.bf16.mxu0 0
    %514 = vmatpush2.bf16.msra.mxu0 0
    %515 = vmatprep.subr.bf16.mxu0 0
    %516 = vmatpush2.bf16.msra.mxu0 0
    %517 = vmatprep.subr.bf16.mxu0 0
    %518 = vmatpush2.bf16.msra.mxu0 0
    %519 = vmatprep.subr.bf16.mxu0 0
    %520 = vmatpush2.bf16.msra.mxu0 0
    %521 = vmatprep.subr.bf16.mxu0 0
    %522 = vmatpush2.bf16.msra.mxu0 0
    %523 = vmatprep.mubr.bf16.mxu0 0
    %524 = vmatmul.mubr.bf16.gmra.mxu0 %v489
    %v525 = vpop.f32.mrf.mxu0
    %v526 = vadd.f32 %v306, %v525
    %v527 = vpop.f32.mrf.mxu0
    %v528 = vpop.f32.mrf.mxu0
    %v529 = vpop.f32.mrf.mxu0
    %530 = vdwg.mxu0
    %v531 = vxor.u32 %v526, 2147483648
    %v532 = vmul.f32 %v531, 1.442695
    %v533 = vpow.pop %v532
    %v534 = vadd.f32 %v533, 1.0
    %v535 = vrcp.pop %v534
    %v536 = vmul.f32 1.0, %v535
    %v537 = vtanh.pop %v526
    %v538 = vmul.f32 %v536, %v393
    %540 = vrot.lane.b32.xlu0 %v537, 32
    %v541 = vpop.permute.xlu0 %540
    %v543 = vmul.f32 %v536, %v541
    %545 = vrot.lane.b32.xlu0 %v543, 32
    %v546 = vpop.permute.xlu0 %545
    %v548 = vadd.f32 %v538, %v546
    %v549 = vtanh.pop %v548
    %551 = vrot.lane.b32.xlu0 %v549, 32
    %v552 = vpop.permute.xlu0 %551
    %v554 = vmul.f32 %v536, %v552
    %556 = vrot.lane.b32.xlu0 %v554, 64
    %v557 = vpop.permute.xlu0 %556
    %s559 = scalar_lea.vmem [#allocation3], 8
    %560 = vst.msk [vmem:[%s559] sm:$0xff] %vm227, %v557
    %s561 = scalar_lea.vmem [#allocation2], 16
    %v562 = vld [vmem:[%s561] sm:$0xff]
    %v563 = vpack.c.bf16 %v478, %v478
    %565 = vrot.lane.b32.xlu0 %v563, 64
    %v566 = vpop.permute.xlu0 %565
    %v568 = vsel %vm227, %v566, 0
    %570 = vmatprep.subr.bf16.mxu0 0
    %571 = vmatpush1.bf16.msra.mxu0 0
    %572 = vmatprep.subr.bf16.mxu0 0
    %573 = vmatpush1.bf16.msra.mxu0 0
    %574 = vmatprep.subr.bf16.mxu0 0
    %575 = vmatpush1.bf16.msra.mxu0 0
    %576 = vmatprep.subr.bf16.mxu0 0
    %577 = vmatpush1.bf16.msra.mxu0 0
    %578 = vmatprep.subr.bf16.mxu0 0
    %579 = vmatpush1.bf16.msra.mxu0 0
    %580 = vmatprep.subr.bf16.mxu0 0
    %581 = vmatpush1.bf16.msra.mxu0 0
    %582 = vmatprep.subr.bf16.mxu0 0
    %583 = vmatpush1.bf16.msra.mxu0 %v224
    %584 = vmatprep.subr.bf16.mxu0 0
    %585 = vmatpush1.bf16.msra.mxu0 %v223
    %586 = vmatprep.subr.bf16.mxu0 0
    %587 = vmatpush2.bf16.msra.mxu0 0
    %588 = vmatprep.subr.bf16.mxu0 0
    %589 = vmatpush2.bf16.msra.mxu0 0
    %590 = vmatprep.subr.bf16.mxu0 0
    %591 = vmatpush2.bf16.msra.mxu0 0
    %592 = vmatprep.subr.bf16.mxu0 0
    %593 = vmatpush2.bf16.msra.mxu0 0
    %594 = vmatprep.subr.bf16.mxu0 0
    %595 = vmatpush2.bf16.msra.mxu0 0
    %596 = vmatprep.subr.bf16.mxu0 0
    %597 = vmatpush2.bf16.msra.mxu0 0
    %598 = vmatprep.subr.bf16.mxu0 0
    %599 = vmatpush2.bf16.msra.mxu0 0
    %600 = vmatprep.subr.bf16.mxu0 0
    %601 = vmatpush2.bf16.msra.mxu0 0
    %602 = vmatprep.mubr.bf16.mxu0 0
    %603 = vmatmul.mubr.bf16.gmra.mxu0 %v568
    %v604 = vpop.f32.mrf.mxu0
    %v605 = vadd.f32 0.0, %v604
    %v606 = vpop.f32.mrf.mxu0
    %v607 = vpop.f32.mrf.mxu0
    %v608 = vpop.f32.mrf.mxu0
    %609 = vdwg.mxu0
    %v610 = vadd.f32 %v562, %v605
    %v611 = vxor.u32 %v610, 2147483648
    %v612 = vmul.f32 %v611, 1.442695
    %v613 = vpow.pop %v612
    %v614 = vadd.f32 %v613, 1.0
    %v615 = vrcp.pop %v614
    %v616 = vmul.f32 1.0, %v615
    %v617 = vtanh.pop %v610
    %v618 = vmul.f32 %v616, %v472
    %620 = vrot.lane.b32.xlu0 %v617, 32
    %v621 = vpop.permute.xlu0 %620
    %v623 = vmul.f32 %v616, %v621
    %625 = vrot.lane.b32.xlu0 %v623, 32
    %v626 = vpop.permute.xlu0 %625
    %v628 = vadd.f32 %v618, %v626
    %v629 = vtanh.pop %v628
    %631 = vrot.lane.b32.xlu0 %v629, 32
    %v632 = vpop.permute.xlu0 %631
    %v634 = vmul.f32 %v616, %v632
    %636 = vrot.lane.b32.xlu0 %v634, 64
    %v637 = vpop.permute.xlu0 %636
    %639 = vrot.lane.b32.xlu0 %v554, 96
    %v640 = vpop.permute.xlu0 %639
    %v642 = vsel %vm227, %v637, %v640
    %v643 = vpack.c.bf16 %v642, %v642
    %v645 = vsel %vm332, %v643, 0
    %647 = vmatprep.subr.bf16.mxu0 0
    %648 = vmatpush1.bf16.msra.mxu0 0
    %649 = vmatprep.subr.bf16.mxu0 0
    %650 = vmatpush1.bf16.msra.mxu0 0
    %651 = vmatprep.subr.bf16.mxu0 0
    %652 = vmatpush1.bf16.msra.mxu0 0
    %653 = vmatprep.subr.bf16.mxu0 0
    %654 = vmatpush1.bf16.msra.mxu0 0
    %655 = vmatprep.subr.bf16.mxu0 0
    %656 = vmatpush1.bf16.msra.mxu0 %v327
    %657 = vmatprep.subr.bf16.mxu0 0
    %658 = vmatpush1.bf16.msra.mxu0 %v326
    %659 = vmatprep.subr.bf16.mxu0 0
    %660 = vmatpush1.bf16.msra.mxu0 %v325
    %661 = vmatprep.subr.bf16.mxu0 0
    %662 = vmatpush1.bf16.msra.mxu0 %v324
    %663 = vmatprep.subr.bf16.mxu0 0
    %664 = vmatpush2.bf16.msra.mxu0 0
    %665 = vmatprep.subr.bf16.mxu0 0
    %666 = vmatpush2.bf16.msra.mxu0 0
    %667 = vmatprep.subr.bf16.mxu0 0
    %668 = vmatpush2.bf16.msra.mxu0 0
    %669 = vmatprep.subr.bf16.mxu0 0
    %670 = vmatpush2.bf16.msra.mxu0 0
    %671 = vmatprep.subr.bf16.mxu0 0
    %672 = vmatpush2.bf16.msra.mxu0 0
    %673 = vmatprep.subr.bf16.mxu0 0
    %674 = vmatpush2.bf16.msra.mxu0 0
    %675 = vmatprep.subr.bf16.mxu0 0
    %676 = vmatpush2.bf16.msra.mxu0 0
    %677 = vmatprep.subr.bf16.mxu0 0
    %678 = vmatpush2.bf16.msra.mxu0 0
    %679 = vmatprep.mubr.bf16.mxu0 0
    %680 = vmatmul.mubr.bf16.gmra.mxu0 %v645
    %v681 = vpop.f32.mrf.mxu0
    %v682 = vadd.f32 %v306, %v681
    %v683 = vpop.f32.mrf.mxu0
    %v684 = vpop.f32.mrf.mxu0
    %v685 = vpop.f32.mrf.mxu0
    %686 = vdwg.mxu0
    %v687 = vxor.u32 %v682, 2147483648
    %v688 = vmul.f32 %v687, 1.442695
    %v689 = vpow.pop %v688
    %v690 = vadd.f32 %v689, 1.0
    %v691 = vrcp.pop %v690
    %v692 = vmul.f32 1.0, %v691
    %v693 = vtanh.pop %v682
    %v694 = vmul.f32 %v692, %v548
    %696 = vrot.lane.b32.xlu0 %v693, 32
    %v697 = vpop.permute.xlu0 %696
    %v699 = vmul.f32 %v692, %v697
    %701 = vrot.lane.b32.xlu0 %v699, 32
    %v702 = vpop.permute.xlu0 %701
    %v704 = vadd.f32 %v694, %v702
    %v705 = vtanh.pop %v704
    %707 = vrot.lane.b32.xlu0 %v705, 32
    %v708 = vpop.permute.xlu0 %707
    %v710 = vmul.f32 %v692, %v708
    %712 = vrot.lane.b32.xlu0 %v710, 64
    %v713 = vpop.permute.xlu0 %712
    %s715 = scalar_lea.vmem [#allocation3], 16
    %716 = vst.msk [vmem:[%s715] sm:$0xff] %vm227, %v713
    %s717 = scalar_lea.vmem [#allocation2], 24
    %v718 = vld [vmem:[%s717] sm:$0xff]
    %v719 = vpack.c.bf16 %v634, %v634
    %721 = vrot.lane.b32.xlu0 %v719, 64
    %v722 = vpop.permute.xlu0 %721
    %v724 = vsel %vm227, %v722, 0
    %726 = vmatprep.subr.bf16.mxu0 0
    %727 = vmatpush1.bf16.msra.mxu0 0
    %728 = vmatprep.subr.bf16.mxu0 0
    %729 = vmatpush1.bf16.msra.mxu0 0
    %730 = vmatprep.subr.bf16.mxu0 0
    %731 = vmatpush1.bf16.msra.mxu0 0
    %732 = vmatprep.subr.bf16.mxu0 0
    %733 = vmatpush1.bf16.msra.mxu0 0
    %734 = vmatprep.subr.bf16.mxu0 0
    %735 = vmatpush1.bf16.msra.mxu0 0
    %736 = vmatprep.subr.bf16.mxu0 0
    %737 = vmatpush1.bf16.msra.mxu0 0
    %738 = vmatprep.subr.bf16.mxu0 0
    %739 = vmatpush1.bf16.msra.mxu0 %v224
    %740 = vmatprep.subr.bf16.mxu0 0
    %741 = vmatpush1.bf16.msra.mxu0 %v223
    %742 = vmatprep.subr.bf16.mxu0 0
    %743 = vmatpush2.bf16.msra.mxu0 0
    %744 = vmatprep.subr.bf16.mxu0 0
    %745 = vmatpush2.bf16.msra.mxu0 0
    %746 = vmatprep.subr.bf16.mxu0 0
    %747 = vmatpush2.bf16.msra.mxu0 0
    %748 = vmatprep.subr.bf16.mxu0 0
    %749 = vmatpush2.bf16.msra.mxu0 0
    %750 = vmatprep.subr.bf16.mxu0 0
    %751 = vmatpush2.bf16.msra.mxu0 0
    %752 = vmatprep.subr.bf16.mxu0 0
    %753 = vmatpush2.bf16.msra.mxu0 0
    %754 = vmatprep.subr.bf16.mxu0 0
    %755 = vmatpush2.bf16.msra.mxu0 0
    %756 = vmatprep.subr.bf16.mxu0 0
    %757 = vmatpush2.bf16.msra.mxu0 0
    %758 = vmatprep.mubr.bf16.mxu0 0
    %759 = vmatmul.mubr.bf16.gmra.mxu0 %v724
    %v760 = vpop.f32.mrf.mxu0
    %v761 = vadd.f32 0.0, %v760
    %v762 = vpop.f32.mrf.mxu0
    %v763 = vpop.f32.mrf.mxu0
    %v764 = vpop.f32.mrf.mxu0
    %765 = vdwg.mxu0
    %v766 = vadd.f32 %v718, %v761
    %v767 = vxor.u32 %v766, 2147483648
    %v768 = vmul.f32 %v767, 1.442695
    %v769 = vpow.pop %v768
    %v770 = vadd.f32 %v769, 1.0
    %v771 = vrcp.pop %v770
    %v772 = vmul.f32 1.0, %v771
    %v773 = vtanh.pop %v766
    %v774 = vmul.f32 %v772, %v628
    %776 = vrot.lane.b32.xlu0 %v773, 32
    %v777 = vpop.permute.xlu0 %776
    %v779 = vmul.f32 %v772, %v777
    %781 = vrot.lane.b32.xlu0 %v779, 32
    %v782 = vpop.permute.xlu0 %781
    %v784 = vadd.f32 %v774, %v782
    %v785 = vtanh.pop %v784
    %787 = vrot.lane.b32.xlu0 %v785, 32
    %v788 = vpop.permute.xlu0 %787
    %v790 = vmul.f32 %v772, %v788
    %792 = vrot.lane.b32.xlu0 %v790, 64
    %v793 = vpop.permute.xlu0 %792
    %795 = vrot.lane.b32.xlu0 %v710, 96
    %v796 = vpop.permute.xlu0 %795
    %v798 = vsel %vm227, %v793, %v796
    %v799 = vpack.c.bf16 %v798, %v798
    %v801 = vsel %vm332, %v799, 0
    %803 = vmatprep.subr.bf16.mxu0 0
    %804 = vmatpush1.bf16.msra.mxu0 0
    %805 = vmatprep.subr.bf16.mxu0 0
    %806 = vmatpush1.bf16.msra.mxu0 0
    %807 = vmatprep.subr.bf16.mxu0 0
    %808 = vmatpush1.bf16.msra.mxu0 0
    %809 = vmatprep.subr.bf16.mxu0 0
    %810 = vmatpush1.bf16.msra.mxu0 0
    %811 = vmatprep.subr.bf16.mxu0 0
    %812 = vmatpush1.bf16.msra.mxu0 %v327
    %813 = vmatprep.subr.bf16.mxu0 0
    %814 = vmatpush1.bf16.msra.mxu0 %v326
    %815 = vmatprep.subr.bf16.mxu0 0
    %816 = vmatpush1.bf16.msra.mxu0 %v325
    %817 = vmatprep.subr.bf16.mxu0 0
    %818 = vmatpush1.bf16.msra.mxu0 %v324
    %819 = vmatprep.subr.bf16.mxu0 0
    %820 = vmatpush2.bf16.msra.mxu0 0
    %821 = vmatprep.subr.bf16.mxu0 0
    %822 = vmatpush2.bf16.msra.mxu0 0
    %823 = vmatprep.subr.bf16.mxu0 0
    %824 = vmatpush2.bf16.msra.mxu0 0
    %825 = vmatprep.subr.bf16.mxu0 0
    %826 = vmatpush2.bf16.msra.mxu0 0
    %827 = vmatprep.subr.bf16.mxu0 0
    %828 = vmatpush2.bf16.msra.mxu0 0
    %829 = vmatprep.subr.bf16.mxu0 0
    %830 = vmatpush2.bf16.msra.mxu0 0
    %831 = vmatprep.subr.bf16.mxu0 0
    %832 = vmatpush2.bf16.msra.mxu0 0
    %833 = vmatprep.subr.bf16.mxu0 0
    %834 = vmatpush2.bf16.msra.mxu0 0
    %835 = vmatprep.mubr.bf16.mxu0 0
    %836 = vmatmul.mubr.bf16.gmra.mxu0 %v801
    %v837 = vpop.f32.mrf.mxu0
    %v838 = vadd.f32 %v306, %v837
    %v839 = vpop.f32.mrf.mxu0
    %v840 = vpop.f32.mrf.mxu0
    %v841 = vpop.f32.mrf.mxu0
    %842 = vdwg.mxu0
    %v843 = vxor.u32 %v838, 2147483648
    %v844 = vmul.f32 %v843, 1.442695
    %v845 = vpow.pop %v844
    %v846 = vadd.f32 %v845, 1.0
    %v847 = vrcp.pop %v846
    %v848 = vmul.f32 1.0, %v847
    %v849 = vtanh.pop %v838
    %v850 = vmul.f32 %v848, %v704
    %852 = vrot.lane.b32.xlu0 %v849, 32
    %v853 = vpop.permute.xlu0 %852
    %v855 = vmul.f32 %v848, %v853
    %857 = vrot.lane.b32.xlu0 %v855, 32
    %v858 = vpop.permute.xlu0 %857
    %v860 = vadd.f32 %v850, %v858
    %v861 = vtanh.pop %v860
    %863 = vrot.lane.b32.xlu0 %v861, 32
    %v864 = vpop.permute.xlu0 %863
    %v866 = vmul.f32 %v848, %v864
    %868 = vrot.lane.b32.xlu0 %v866, 64
    %v869 = vpop.permute.xlu0 %868
    %s871 = scalar_lea.vmem [#allocation3], 24
    %872 = vst.msk [vmem:[%s871] sm:$0xff] %vm227, %v869
    %s873 = scalar_lea.vmem [#allocation2], 32
    %v874 = vld [vmem:[%s873] sm:$0xff]
    %v875 = vpack.c.bf16 %v790, %v790
    %877 = vrot.lane.b32.xlu0 %v875, 64
    %v878 = vpop.permute.xlu0 %877
    %v880 = vsel %vm227, %v878, 0
    %882 = vmatprep.subr.bf16.mxu0 0
    %883 = vmatpush1.bf16.msra.mxu0 0
    %884 = vmatprep.subr.bf16.mxu0 0
    %885 = vmatpush1.bf16.msra.mxu0 0
    %886 = vmatprep.subr.bf16.mxu0 0
    %887 = vmatpush1.bf16.msra.mxu0 0
    %888 = vmatprep.subr.bf16.mxu0 0
    %889 = vmatpush1.bf16.msra.mxu0 0
    %890 = vmatprep.subr.bf16.mxu0 0
    %891 = vmatpush1.bf16.msra.mxu0 0
    %892 = vmatprep.subr.bf16.mxu0 0
    %893 = vmatpush1.bf16.msra.mxu0 0
    %894 = vmatprep.subr.bf16.mxu0 0
    %895 = vmatpush1.bf16.msra.mxu0 %v224
    %896 = vmatprep.subr.bf16.mxu0 0
    %897 = vmatpush1.bf16.msra.mxu0 %v223
    %898 = vmatprep.subr.bf16.mxu0 0
    %899 = vmatpush2.bf16.msra.mxu0 0
    %900 = vmatprep.subr.bf16.mxu0 0
    %901 = vmatpush2.bf16.msra.mxu0 0
    %902 = vmatprep.subr.bf16.mxu0 0
    %903 = vmatpush2.bf16.msra.mxu0 0
    %904 = vmatprep.subr.bf16.mxu0 0
    %905 = vmatpush2.bf16.msra.mxu0 0
    %906 = vmatprep.subr.bf16.mxu0 0
    %907 = vmatpush2.bf16.msra.mxu0 0
    %908 = vmatprep.subr.bf16.mxu0 0
    %909 = vmatpush2.bf16.msra.mxu0 0
    %910 = vmatprep.subr.bf16.mxu0 0
    %911 = vmatpush2.bf16.msra.mxu0 0
    %912 = vmatprep.subr.bf16.mxu0 0
    %913 = vmatpush2.bf16.msra.mxu0 0
    %914 = vmatprep.mubr.bf16.mxu0 0
    %915 = vmatmul.mubr.bf16.gmra.mxu0 %v880
    %v916 = vpop.f32.mrf.mxu0
    %v917 = vadd.f32 0.0, %v916
    %v918 = vpop.f32.mrf.mxu0
    %v919 = vpop.f32.mrf.mxu0
    %v920 = vpop.f32.mrf.mxu0
    %921 = vdwg.mxu0
    %v922 = vadd.f32 %v874, %v917
    %v923 = vxor.u32 %v922, 2147483648
    %v924 = vmul.f32 %v923, 1.442695
    %v925 = vpow.pop %v924
    %v926 = vadd.f32 %v925, 1.0
    %v927 = vrcp.pop %v926
    %v928 = vmul.f32 1.0, %v927
    %v929 = vtanh.pop %v922
    %v930 = vmul.f32 %v928, %v784
    %932 = vrot.lane.b32.xlu0 %v929, 32
    %v933 = vpop.permute.xlu0 %932
    %v935 = vmul.f32 %v928, %v933
    %937 = vrot.lane.b32.xlu0 %v935, 32
    %v938 = vpop.permute.xlu0 %937
    %v940 = vadd.f32 %v930, %v938
    %v941 = vtanh.pop %v940
    %943 = vrot.lane.b32.xlu0 %v941, 32
    %v944 = vpop.permute.xlu0 %943
    %v946 = vmul.f32 %v928, %v944
    %948 = vrot.lane.b32.xlu0 %v946, 64
    %v949 = vpop.permute.xlu0 %948
    %951 = vrot.lane.b32.xlu0 %v866, 96
    %v952 = vpop.permute.xlu0 %951
    %v954 = vsel %vm227, %v949, %v952
    %v955 = vpack.c.bf16 %v954, %v954
    %v957 = vsel %vm332, %v955, 0
    %959 = vmatprep.subr.bf16.mxu0 0
    %960 = vmatpush1.bf16.msra.mxu0 0
    %961 = vmatprep.subr.bf16.mxu0 0
    %962 = vmatpush1.bf16.msra.mxu0 0
    %963 = vmatprep.subr.bf16.mxu0 0
    %964 = vmatpush1.bf16.msra.mxu0 0
    %965 = vmatprep.subr.bf16.mxu0 0
    %966 = vmatpush1.bf16.msra.mxu0 0
    %967 = vmatprep.subr.bf16.mxu0 0
    %968 = vmatpush1.bf16.msra.mxu0 %v327
    %969 = vmatprep.subr.bf16.mxu0 0
    %970 = vmatpush1.bf16.msra.mxu0 %v326
    %971 = vmatprep.subr.bf16.mxu0 0
    %972 = vmatpush1.bf16.msra.mxu0 %v325
    %973 = vmatprep.subr.bf16.mxu0 0
    %974 = vmatpush1.bf16.msra.mxu0 %v324
    %975 = vmatprep.subr.bf16.mxu0 0
    %976 = vmatpush2.bf16.msra.mxu0 0
    %977 = vmatprep.subr.bf16.mxu0 0
    %978 = vmatpush2.bf16.msra.mxu0 0
    %979 = vmatprep.subr.bf16.mxu0 0
    %980 = vmatpush2.bf16.msra.mxu0 0
    %981 = vmatprep.subr.bf16.mxu0 0
    %982 = vmatpush2.bf16.msra.mxu0 0
    %983 = vmatprep.subr.bf16.mxu0 0
    %984 = vmatpush2.bf16.msra.mxu0 0
    %985 = vmatprep.subr.bf16.mxu0 0
    %986 = vmatpush2.bf16.msra.mxu0 0
    %987 = vmatprep.subr.bf16.mxu0 0
    %988 = vmatpush2.bf16.msra.mxu0 0
    %989 = vmatprep.subr.bf16.mxu0 0
    %990 = vmatpush2.bf16.msra.mxu0 0
    %991 = vmatprep.mubr.bf16.mxu0 0
    %992 = vmatmul.mubr.bf16.gmra.mxu0 %v957
    %v993 = vpop.f32.mrf.mxu0
    %v994 = vadd.f32 %v306, %v993
    %v995 = vpop.f32.mrf.mxu0
    %v996 = vpop.f32.mrf.mxu0
    %v997 = vpop.f32.mrf.mxu0
    %998 = vdwg.mxu0
    %v999 = vxor.u32 %v994, 2147483648
    %v1000 = vmul.f32 %v999, 1.442695
    %v1001 = vpow.pop %v1000
    %v1002 = vadd.f32 %v1001, 1.0
    %v1003 = vrcp.pop %v1002
    %v1004 = vmul.f32 1.0, %v1003
    %v1005 = vtanh.pop %v994
    %v1006 = vmul.f32 %v1004, %v860
    %1008 = vrot.lane.b32.xlu0 %v1005, 32
    %v1009 = vpop.permute.xlu0 %1008
    %v1011 = vmul.f32 %v1004, %v1009
    %1013 = vrot.lane.b32.xlu0 %v1011, 32
    %v1014 = vpop.permute.xlu0 %1013
    %v1016 = vadd.f32 %v1006, %v1014
    %v1017 = vtanh.pop %v1016
    %1019 = vrot.lane.b32.xlu0 %v1017, 32
    %v1020 = vpop.permute.xlu0 %1019
    %v1022 = vmul.f32 %v1004, %v1020
    %1024 = vrot.lane.b32.xlu0 %v1022, 64
    %v1025 = vpop.permute.xlu0 %1024
    %s1027 = scalar_lea.vmem [#allocation3], 32
    %1028 = vst.msk [vmem:[%s1027] sm:$0xff] %vm227, %v1025
    %s1029 = scalar_lea.vmem [#allocation2], 40
    %v1030 = vld [vmem:[%s1029] sm:$0xff]
    %v1031 = vpack.c.bf16 %v946, %v946
    %1033 = vrot.lane.b32.xlu0 %v1031, 64
    %v1034 = vpop.permute.xlu0 %1033
    %v1036 = vsel %vm227, %v1034, 0
    %1038 = vmatprep.subr.bf16.mxu0 0
    %1039 = vmatpush1.bf16.msra.mxu0 0
    %1040 = vmatprep.subr.bf16.mxu0 0
    %1041 = vmatpush1.bf16.msra.mxu0 0
    %1042 = vmatprep.subr.bf16.mxu0 0
    %1043 = vmatpush1.bf16.msra.mxu0 0
    %1044 = vmatprep.subr.bf16.mxu0 0
    %1045 = vmatpush1.bf16.msra.mxu0 0
    %1046 = vmatprep.subr.bf16.mxu0 0
    %1047 = vmatpush1.bf16.msra.mxu0 0
    %1048 = vmatprep.subr.bf16.mxu0 0
    %1049 = vmatpush1.bf16.msra.mxu0 0
    %1050 = vmatprep.subr.bf16.mxu0 0
    %1051 = vmatpush1.bf16.msra.mxu0 %v224
    %1052 = vmatprep.subr.bf16.mxu0 0
    %1053 = vmatpush1.bf16.msra.mxu0 %v223
    %1054 = vmatprep.subr.bf16.mxu0 0
    %1055 = vmatpush2.bf16.msra.mxu0 0
    %1056 = vmatprep.subr.bf16.mxu0 0
    %1057 = vmatpush2.bf16.msra.mxu0 0
    %1058 = vmatprep.subr.bf16.mxu0 0
    %1059 = vmatpush2.bf16.msra.mxu0 0
    %1060 = vmatprep.subr.bf16.mxu0 0
    %1061 = vmatpush2.bf16.msra.mxu0 0
    %1062 = vmatprep.subr.bf16.mxu0 0
    %1063 = vmatpush2.bf16.msra.mxu0 0
    %1064 = vmatprep.subr.bf16.mxu0 0
    %1065 = vmatpush2.bf16.msra.mxu0 0
    %1066 = vmatprep.subr.bf16.mxu0 0
    %1067 = vmatpush2.bf16.msra.mxu0 0
    %1068 = vmatprep.subr.bf16.mxu0 0
    %1069 = vmatpush2.bf16.msra.mxu0 0
    %1070 = vmatprep.mubr.bf16.mxu0 0
    %1071 = vmatmul.mubr.bf16.gmra.mxu0 %v1036
    %v1072 = vpop.f32.mrf.mxu0
    %v1073 = vadd.f32 0.0, %v1072
    %v1074 = vpop.f32.mrf.mxu0
    %v1075 = vpop.f32.mrf.mxu0
    %v1076 = vpop.f32.mrf.mxu0
    %1077 = vdwg.mxu0
    %v1078 = vadd.f32 %v1030, %v1073
    %v1079 = vxor.u32 %v1078, 2147483648
    %v1080 = vmul.f32 %v1079, 1.442695
    %v1081 = vpow.pop %v1080
    %v1082 = vadd.f32 %v1081, 1.0
    %v1083 = vrcp.pop %v1082
    %v1084 = vmul.f32 1.0, %v1083
    %v1085 = vtanh.pop %v1078
    %v1086 = vmul.f32 %v1084, %v940
    %1088 = vrot.lane.b32.xlu0 %v1085, 32
    %v1089 = vpop.permute.xlu0 %1088
    %v1091 = vmul.f32 %v1084, %v1089
    %1093 = vrot.lane.b32.xlu0 %v1091, 32
    %v1094 = vpop.permute.xlu0 %1093
    %v1096 = vadd.f32 %v1086, %v1094
    %v1097 = vtanh.pop %v1096
    %1099 = vrot.lane.b32.xlu0 %v1097, 32
    %v1100 = vpop.permute.xlu0 %1099
    %v1102 = vmul.f32 %v1084, %v1100
    %1104 = vrot.lane.b32.xlu0 %v1102, 64
    %v1105 = vpop.permute.xlu0 %1104
    %1107 = vrot.lane.b32.xlu0 %v1022, 96
    %v1108 = vpop.permute.xlu0 %1107
    %v1110 = vsel %vm227, %v1105, %v1108
    %v1111 = vpack.c.bf16 %v1110, %v1110
    %v1113 = vsel %vm332, %v1111, 0
    %1115 = vmatprep.subr.bf16.mxu0 0
    %1116 = vmatpush1.bf16.msra.mxu0 0
    %1117 = vmatprep.subr.bf16.mxu0 0
    %1118 = vmatpush1.bf16.msra.mxu0 0
    %1119 = vmatprep.subr.bf16.mxu0 0
    %1120 = vmatpush1.bf16.msra.mxu0 0
    %1121 = vmatprep.subr.bf16.mxu0 0
    %1122 = vmatpush1.bf16.msra.mxu0 0
    %1123 = vmatprep.subr.bf16.mxu0 0
    %1124 = vmatpush1.bf16.msra.mxu0 %v327
    %1125 = vmatprep.subr.bf16.mxu0 0
    %1126 = vmatpush1.bf16.msra.mxu0 %v326
    %1127 = vmatprep.subr.bf16.mxu0 0
    %1128 = vmatpush1.bf16.msra.mxu0 %v325
    %1129 = vmatprep.subr.bf16.mxu0 0
    %1130 = vmatpush1.bf16.msra.mxu0 %v324
    %1131 = vmatprep.subr.bf16.mxu0 0
    %1132 = vmatpush2.bf16.msra.mxu0 0
    %1133 = vmatprep.subr.bf16.mxu0 0
    %1134 = vmatpush2.bf16.msra.mxu0 0
    %1135 = vmatprep.subr.bf16.mxu0 0
    %1136 = vmatpush2.bf16.msra.mxu0 0
    %1137 = vmatprep.subr.bf16.mxu0 0
    %1138 = vmatpush2.bf16.msra.mxu0 0
    %1139 = vmatprep.subr.bf16.mxu0 0
    %1140 = vmatpush2.bf16.msra.mxu0 0
    %1141 = vmatprep.subr.bf16.mxu0 0
    %1142 = vmatpush2.bf16.msra.mxu0 0
    %1143 = vmatprep.subr.bf16.mxu0 0
    %1144 = vmatpush2.bf16.msra.mxu0 0
    %1145 = vmatprep.subr.bf16.mxu0 0
    %1146 = vmatpush2.bf16.msra.mxu0 0
    %1147 = vmatprep.mubr.bf16.mxu0 0
    %1148 = vmatmul.mubr.bf16.gmra.mxu0 %v1113
    %v1149 = vpop.f32.mrf.mxu0
    %v1150 = vadd.f32 %v306, %v1149
    %v1151 = vpop.f32.mrf.mxu0
    %v1152 = vpop.f32.mrf.mxu0
    %v1153 = vpop.f32.mrf.mxu0
    %1154 = vdwg.mxu0
    %v1155 = vxor.u32 %v1150, 2147483648
    %v1156 = vmul.f32 %v1155, 1.442695
    %v1157 = vpow.pop %v1156
    %v1158 = vadd.f32 %v1157, 1.0
    %v1159 = vrcp.pop %v1158
    %v1160 = vmul.f32 1.0, %v1159
    %v1161 = vtanh.pop %v1150
    %v1162 = vmul.f32 %v1160, %v1016
    %1164 = vrot.lane.b32.xlu0 %v1161, 32
    %v1165 = vpop.permute.xlu0 %1164
    %v1167 = vmul.f32 %v1160, %v1165
    %1169 = vrot.lane.b32.xlu0 %v1167, 32
    %v1170 = vpop.permute.xlu0 %1169
    %v1172 = vadd.f32 %v1162, %v1170
    %v1173 = vtanh.pop %v1172
    %1175 = vrot.lane.b32.xlu0 %v1173, 32
    %v1176 = vpop.permute.xlu0 %1175
    %v1178 = vmul.f32 %v1160, %v1176
    %1180 = vrot.lane.b32.xlu0 %v1178, 64
    %v1181 = vpop.permute.xlu0 %1180
    %s1183 = scalar_lea.vmem [#allocation3], 40
    %1184 = vst.msk [vmem:[%s1183] sm:$0xff] %vm227, %v1181
    %s1185 = scalar_lea.vmem [#allocation2], 48
    %v1186 = vld [vmem:[%s1185] sm:$0xff]
    %v1187 = vpack.c.bf16 %v1102, %v1102
    %1189 = vrot.lane.b32.xlu0 %v1187, 64
    %v1190 = vpop.permute.xlu0 %1189
    %v1192 = vsel %vm227, %v1190, 0
    %1194 = vmatprep.subr.bf16.mxu0 0
    %1195 = vmatpush1.bf16.msra.mxu0 0
    %1196 = vmatprep.subr.bf16.mxu0 0
    %1197 = vmatpush1.bf16.msra.mxu0 0
    %1198 = vmatprep.subr.bf16.mxu0 0
    %1199 = vmatpush1.bf16.msra.mxu0 0
    %1200 = vmatprep.subr.bf16.mxu0 0
    %1201 = vmatpush1.bf16.msra.mxu0 0
    %1202 = vmatprep.subr.bf16.mxu0 0
    %1203 = vmatpush1.bf16.msra.mxu0 0
    %1204 = vmatprep.subr.bf16.mxu0 0
    %1205 = vmatpush1.bf16.msra.mxu0 0
    %1206 = vmatprep.subr.bf16.mxu0 0
    %1207 = vmatpush1.bf16.msra.mxu0 %v224
    %1208 = vmatprep.subr.bf16.mxu0 0
    %1209 = vmatpush1.bf16.msra.mxu0 %v223
    %1210 = vmatprep.subr.bf16.mxu0 0
    %1211 = vmatpush2.bf16.msra.mxu0 0
    %1212 = vmatprep.subr.bf16.mxu0 0
    %1213 = vmatpush2.bf16.msra.mxu0 0
    %1214 = vmatprep.subr.bf16.mxu0 0
    %1215 = vmatpush2.bf16.msra.mxu0 0
    %1216 = vmatprep.subr.bf16.mxu0 0
    %1217 = vmatpush2.bf16.msra.mxu0 0
    %1218 = vmatprep.subr.bf16.mxu0 0
    %1219 = vmatpush2.bf16.msra.mxu0 0
    %1220 = vmatprep.subr.bf16.mxu0 0
    %1221 = vmatpush2.bf16.msra.mxu0 0
    %1222 = vmatprep.subr.bf16.mxu0 0
    %1223 = vmatpush2.bf16.msra.mxu0 0
    %1224 = vmatprep.subr.bf16.mxu0 0
    %1225 = vmatpush2.bf16.msra.mxu0 0
    %1226 = vmatprep.mubr.bf16.mxu0 0
    %1227 = vmatmul.mubr.bf16.gmra.mxu0 %v1192
    %v1228 = vpop.f32.mrf.mxu0
    %v1229 = vadd.f32 0.0, %v1228
    %v1230 = vpop.f32.mrf.mxu0
    %v1231 = vpop.f32.mrf.mxu0
    %v1232 = vpop.f32.mrf.mxu0
    %1233 = vdwg.mxu0
    %v1234 = vadd.f32 %v1186, %v1229
    %v1235 = vxor.u32 %v1234, 2147483648
    %v1236 = vmul.f32 %v1235, 1.442695
    %v1237 = vpow.pop %v1236
    %v1238 = vadd.f32 %v1237, 1.0
    %v1239 = vrcp.pop %v1238
    %v1240 = vmul.f32 1.0, %v1239
    %v1241 = vtanh.pop %v1234
    %v1242 = vmul.f32 %v1240, %v1096
    %1244 = vrot.lane.b32.xlu0 %v1241, 32
    %v1245 = vpop.permute.xlu0 %1244
    %v1247 = vmul.f32 %v1240, %v1245
    %1249 = vrot.lane.b32.xlu0 %v1247, 32
    %v1250 = vpop.permute.xlu0 %1249
    %v1252 = vadd.f32 %v1242, %v1250
    %v1253 = vtanh.pop %v1252
    %1255 = vrot.lane.b32.xlu0 %v1253, 32
    %v1256 = vpop.permute.xlu0 %1255
    %v1258 = vmul.f32 %v1240, %v1256
    %1260 = vrot.lane.b32.xlu0 %v1258, 64
    %v1261 = vpop.permute.xlu0 %1260
    %1263 = vrot.lane.b32.xlu0 %v1178, 96
    %v1264 = vpop.permute.xlu0 %1263
    %v1266 = vsel %vm227, %v1261, %v1264
    %v1267 = vpack.c.bf16 %v1266, %v1266
    %v1269 = vsel %vm332, %v1267, 0
    %1271 = vmatprep.subr.bf16.mxu0 0
    %1272 = vmatpush1.bf16.msra.mxu0 0
    %1273 = vmatprep.subr.bf16.mxu0 0
    %1274 = vmatpush1.bf16.msra.mxu0 0
    %1275 = vmatprep.subr.bf16.mxu0 0
    %1276 = vmatpush1.bf16.msra.mxu0 0
    %1277 = vmatprep.subr.bf16.mxu0 0
    %1278 = vmatpush1.bf16.msra.mxu0 0
    %1279 = vmatprep.subr.bf16.mxu0 0
    %1280 = vmatpush1.bf16.msra.mxu0 %v327
    %1281 = vmatprep.subr.bf16.mxu0 0
    %1282 = vmatpush1.bf16.msra.mxu0 %v326
    %1283 = vmatprep.subr.bf16.mxu0 0
    %1284 = vmatpush1.bf16.msra.mxu0 %v325
    %1285 = vmatprep.subr.bf16.mxu0 0
    %1286 = vmatpush1.bf16.msra.mxu0 %v324
    %1287 = vmatprep.subr.bf16.mxu0 0
    %1288 = vmatpush2.bf16.msra.mxu0 0
    %1289 = vmatprep.subr.bf16.mxu0 0
    %1290 = vmatpush2.bf16.msra.mxu0 0
    %1291 = vmatprep.subr.bf16.mxu0 0
    %1292 = vmatpush2.bf16.msra.mxu0 0
    %1293 = vmatprep.subr.bf16.mxu0 0
    %1294 = vmatpush2.bf16.msra.mxu0 0
    %1295 = vmatprep.subr.bf16.mxu0 0
    %1296 = vmatpush2.bf16.msra.mxu0 0
    %1297 = vmatprep.subr.bf16.mxu0 0
    %1298 = vmatpush2.bf16.msra.mxu0 0
    %1299 = vmatprep.subr.bf16.mxu0 0
    %1300 = vmatpush2.bf16.msra.mxu0 0
    %1301 = vmatprep.subr.bf16.mxu0 0
    %1302 = vmatpush2.bf16.msra.mxu0 0
    %1303 = vmatprep.mubr.bf16.mxu0 0
    %1304 = vmatmul.mubr.bf16.gmra.mxu0 %v1269
    %v1305 = vpop.f32.mrf.mxu0
    %v1306 = vadd.f32 %v306, %v1305
    %v1307 = vpop.f32.mrf.mxu0
    %v1308 = vpop.f32.mrf.mxu0
    %v1309 = vpop.f32.mrf.mxu0
    %1310 = vdwg.mxu0
    %v1311 = vxor.u32 %v1306, 2147483648
    %v1312 = vmul.f32 %v1311, 1.442695
    %v1313 = vpow.pop %v1312
    %v1314 = vadd.f32 %v1313, 1.0
    %v1315 = vrcp.pop %v1314
    %v1316 = vmul.f32 1.0, %v1315
    %v1317 = vtanh.pop %v1306
    %v1318 = vmul.f32 %v1316, %v1172
    %1320 = vrot.lane.b32.xlu0 %v1317, 32
    %v1321 = vpop.permute.xlu0 %1320
    %v1323 = vmul.f32 %v1316, %v1321
    %1325 = vrot.lane.b32.xlu0 %v1323, 32
    %v1326 = vpop.permute.xlu0 %1325
    %v1328 = vadd.f32 %v1318, %v1326
    %v1329 = vtanh.pop %v1328
    %1331 = vrot.lane.b32.xlu0 %v1329, 32
    %v1332 = vpop.permute.xlu0 %1331
    %v1334 = vmul.f32 %v1316, %v1332
    %1336 = vrot.lane.b32.xlu0 %v1334, 64
    %v1337 = vpop.permute.xlu0 %1336
    %s1339 = scalar_lea.vmem [#allocation3], 48
    %1340 = vst.msk [vmem:[%s1339] sm:$0xff] %vm227, %v1337
    %s1341 = scalar_lea.vmem [#allocation2], 56
    %v1342 = vld [vmem:[%s1341] sm:$0xff]
    %v1343 = vpack.c.bf16 %v1258, %v1258
    %1345 = vrot.lane.b32.xlu0 %v1343, 64
    %v1346 = vpop.permute.xlu0 %1345
    %v1348 = vsel %vm227, %v1346, 0
    %1350 = vmatprep.subr.bf16.mxu0 0
    %1351 = vmatpush1.bf16.msra.mxu0 0
    %1352 = vmatprep.subr.bf16.mxu0 0
    %1353 = vmatpush1.bf16.msra.mxu0 0
    %1354 = vmatprep.subr.bf16.mxu0 0
    %1355 = vmatpush1.bf16.msra.mxu0 0
    %1356 = vmatprep.subr.bf16.mxu0 0
    %1357 = vmatpush1.bf16.msra.mxu0 0
    %1358 = vmatprep.subr.bf16.mxu0 0
    %1359 = vmatpush1.bf16.msra.mxu0 0
    %1360 = vmatprep.subr.bf16.mxu0 0
    %1361 = vmatpush1.bf16.msra.mxu0 0
    %1362 = vmatprep.subr.bf16.mxu0 0
    %1363 = vmatpush1.bf16.msra.mxu0 %v224
    %1364 = vmatprep.subr.bf16.mxu0 0
    %1365 = vmatpush1.bf16.msra.mxu0 %v223
    %1366 = vmatprep.subr.bf16.mxu0 0
    %1367 = vmatpush2.bf16.msra.mxu0 0
    %1368 = vmatprep.subr.bf16.mxu0 0
    %1369 = vmatpush2.bf16.msra.mxu0 0
    %1370 = vmatprep.subr.bf16.mxu0 0
    %1371 = vmatpush2.bf16.msra.mxu0 0
    %1372 = vmatprep.subr.bf16.mxu0 0
    %1373 = vmatpush2.bf16.msra.mxu0 0
    %1374 = vmatprep.subr.bf16.mxu0 0
    %1375 = vmatpush2.bf16.msra.mxu0 0
    %1376 = vmatprep.subr.bf16.mxu0 0
    %1377 = vmatpush2.bf16.msra.mxu0 0
    %1378 = vmatprep.subr.bf16.mxu0 0
    %1379 = vmatpush2.bf16.msra.mxu0 0
    %1380 = vmatprep.subr.bf16.mxu0 0
    %1381 = vmatpush2.bf16.msra.mxu0 0
    %1382 = vmatprep.mubr.bf16.mxu0 0
    %1383 = vmatmul.mubr.bf16.gmra.mxu0 %v1348
    %v1384 = vpop.f32.mrf.mxu0
    %v1385 = vadd.f32 0.0, %v1384
    %v1386 = vpop.f32.mrf.mxu0
    %v1387 = vpop.f32.mrf.mxu0
    %v1388 = vpop.f32.mrf.mxu0
    %1389 = vdwg.mxu0
    %v1390 = vadd.f32 %v1342, %v1385
    %v1391 = vxor.u32 %v1390, 2147483648
    %v1392 = vmul.f32 %v1391, 1.442695
    %v1393 = vpow.pop %v1392
    %v1394 = vadd.f32 %v1393, 1.0
    %v1395 = vrcp.pop %v1394
    %v1396 = vmul.f32 1.0, %v1395
    %v1397 = vtanh.pop %v1390
    %v1398 = vmul.f32 %v1396, %v1252
    %1400 = vrot.lane.b32.xlu0 %v1397, 32
    %v1401 = vpop.permute.xlu0 %1400
    %v1403 = vmul.f32 %v1396, %v1401
    %1405 = vrot.lane.b32.xlu0 %v1403, 32
    %v1406 = vpop.permute.xlu0 %1405
    %v1408 = vadd.f32 %v1398, %v1406
    %v1409 = vtanh.pop %v1408
    %1411 = vrot.lane.b32.xlu0 %v1409, 32
    %v1412 = vpop.permute.xlu0 %1411
    %v1414 = vmul.f32 %v1396, %v1412
    %1416 = vrot.lane.b32.xlu0 %v1414, 64
    %v1417 = vpop.permute.xlu0 %1416
    %1419 = vrot.lane.b32.xlu0 %v1334, 96
    %v1420 = vpop.permute.xlu0 %1419
    %v1422 = vsel %vm227, %v1417, %v1420
    %v1423 = vpack.c.bf16 %v1422, %v1422
    %v1425 = vsel %vm332, %v1423, 0
    %1427 = vmatprep.subr.bf16.mxu0 0
    %1428 = vmatpush1.bf16.msra.mxu0 0
    %1429 = vmatprep.subr.bf16.mxu0 0
    %1430 = vmatpush1.bf16.msra.mxu0 0
    %1431 = vmatprep.subr.bf16.mxu0 0
    %1432 = vmatpush1.bf16.msra.mxu0 0
    %1433 = vmatprep.subr.bf16.mxu0 0
    %1434 = vmatpush1.bf16.msra.mxu0 0
    %1435 = vmatprep.subr.bf16.mxu0 0
    %1436 = vmatpush1.bf16.msra.mxu0 %v327
    %1437 = vmatprep.subr.bf16.mxu0 0
    %1438 = vmatpush1.bf16.msra.mxu0 %v326
    %1439 = vmatprep.subr.bf16.mxu0 0
    %1440 = vmatpush1.bf16.msra.mxu0 %v325
    %1441 = vmatprep.subr.bf16.mxu0 0
    %1442 = vmatpush1.bf16.msra.mxu0 %v324
    %1443 = vmatprep.subr.bf16.mxu0 0
    %1444 = vmatpush2.bf16.msra.mxu0 0
    %1445 = vmatprep.subr.bf16.mxu0 0
    %1446 = vmatpush2.bf16.msra.mxu0 0
    %1447 = vmatprep.subr.bf16.mxu0 0
    %1448 = vmatpush2.bf16.msra.mxu0 0
    %1449 = vmatprep.subr.bf16.mxu0 0
    %1450 = vmatpush2.bf16.msra.mxu0 0
    %1451 = vmatprep.subr.bf16.mxu0 0
    %1452 = vmatpush2.bf16.msra.mxu0 0
    %1453 = vmatprep.subr.bf16.mxu0 0
    %1454 = vmatpush2.bf16.msra.mxu0 0
    %1455 = vmatprep.subr.bf16.mxu0 0
    %1456 = vmatpush2.bf16.msra.mxu0 0
    %1457 = vmatprep.subr.bf16.mxu0 0
    %1458 = vmatpush2.bf16.msra.mxu0 0
    %1459 = vmatprep.mubr.bf16.mxu0 0
    %1460 = vmatmul.mubr.bf16.gmra.mxu0 %v1425
    %v1461 = vpop.f32.mrf.mxu0
    %v1462 = vadd.f32 %v306, %v1461
    %v1463 = vpop.f32.mrf.mxu0
    %v1464 = vpop.f32.mrf.mxu0
    %v1465 = vpop.f32.mrf.mxu0
    %1466 = vdwg.mxu0
    %v1467 = vxor.u32 %v1462, 2147483648
    %v1468 = vmul.f32 %v1467, 1.442695
    %v1469 = vpow.pop %v1468
    %v1470 = vadd.f32 %v1469, 1.0
    %v1471 = vrcp.pop %v1470
    %v1472 = vmul.f32 1.0, %v1471
    %v1473 = vtanh.pop %v1462
    %v1474 = vmul.f32 %v1472, %v1328
    %1476 = vrot.lane.b32.xlu0 %v1473, 32
    %v1477 = vpop.permute.xlu0 %1476
    %v1479 = vmul.f32 %v1472, %v1477
    %1481 = vrot.lane.b32.xlu0 %v1479, 32
    %v1482 = vpop.permute.xlu0 %1481
    %v1484 = vadd.f32 %v1474, %v1482
    %v1485 = vtanh.pop %v1484
    %1487 = vrot.lane.b32.xlu0 %v1485, 32
    %v1488 = vpop.permute.xlu0 %1487
    %v1490 = vmul.f32 %v1472, %v1488
    %1492 = vrot.lane.b32.xlu0 %v1490, 64
    %v1493 = vpop.permute.xlu0 %1492
    %s1495 = scalar_lea.vmem [#allocation3], 56
    %1496 = vst.msk [vmem:[%s1495] sm:$0xff] %vm227, %v1493
    %v1497 = vld [vmem:[#allocation3] sm:$0xff]
    %v1498 = vld [vmem:[#allocation3 + $0x8] sm:$0xff]
    %v1499 = vld [vmem:[#allocation3 + $0x10] sm:$0xff]
    %v1500 = vld [vmem:[#allocation3 + $0x18] sm:$0xff]
    %v1501 = vld [vmem:[#allocation3 + $0x20] sm:$0xff]
    %v1502 = vld [vmem:[#allocation3 + $0x28] sm:$0xff]
    %v1503 = vld [vmem:[#allocation3 + $0x30] sm:$0xff]
    %v1504 = vld [vmem:[#allocation3 + $0x38] sm:$0xff]
    %v1505 = vpack.c.bf16 %v1498, %v1497
    %v1506 = vpack.c.bf16 %v1500, %v1499
    %v1507 = vpack.c.bf16 %v1502, %v1501
    %v1508 = vpack.c.bf16 %v1504, %v1503
    %v1509 = vld [vmem:[%s6] sm:$0xf]
    %v1510 = vld [vmem:[%s6 + $0x4] sm:$0xf]
    %v1511 = vld [vmem:[%s6 + $0x8] sm:$0xf]
    %v1512 = vld [vmem:[%s6 + $0xc] sm:$0xf]
    %v1513 = vld [vmem:[%s7] sm:$0x1]
    %v1515 = vlaneseq
    %v1516 = vshrl.u32 %v1515, 7
    %v1517 = vsub.s32 0, %v1516
    %v1518 = vrot.slane %v1513, %v1517
    %v1524 = vunpack.c.l.b16 %v1509
    %v1525 = vunpack.c.l.b16 %v1510
    %v1526 = vunpack.c.l.b16 %v1511
    %v1527 = vunpack.c.l.b16 %v1512
    %v1528 = vpack.c.b16 %v1525, %v1524
    %v1529 = vpack.c.b16 %v1527, %v1526
    %v1533 = vsel %vm227, %v1505, 0
    %v1536 = vsel %vm227, %v1506, 0
    %v1539 = vsel %vm227, %v1507, 0
    %v1542 = vsel %vm227, %v1508, 0
    %1544 = vmatprep.subr.bf16.mxu0 0
    %1545 = vmatpush1.bf16.msra.mxu0 0
    %1546 = vmatprep.subr.bf16.mxu0 0
    %1547 = vmatpush1.bf16.msra.mxu0 0
    %1548 = vmatprep.subr.bf16.mxu0 0
    %1549 = vmatpush1.bf16.msra.mxu0 0
    %1550 = vmatprep.subr.bf16.mxu0 0
    %1551 = vmatpush1.bf16.msra.mxu0 0
    %1552 = vmatprep.subr.bf16.mxu0 0
    %1553 = vmatpush1.bf16.msra.mxu0 0
    %1554 = vmatprep.subr.bf16.mxu0 0
    %1555 = vmatpush1.bf16.msra.mxu0 0
    %1556 = vmatprep.subr.bf16.mxu0 0
    %1557 = vmatpush1.bf16.msra.mxu0 %v1529
    %1558 = vmatprep.subr.bf16.mxu0 0
    %1559 = vmatpush1.bf16.msra.mxu0 %v1528
    %1560 = vmatprep.subr.bf16.mxu0 0
    %1561 = vmatpush2.bf16.msra.mxu0 0
    %1562 = vmatprep.subr.bf16.mxu0 0
    %1563 = vmatpush2.bf16.msra.mxu0 0
    %1564 = vmatprep.subr.bf16.mxu0 0
    %1565 = vmatpush2.bf16.msra.mxu0 0
    %1566 = vmatprep.subr.bf16.mxu0 0
    %1567 = vmatpush2.bf16.msra.mxu0 0
    %1568 = vmatprep.subr.bf16.mxu0 0
    %1569 = vmatpush2.bf16.msra.mxu0 0
    %1570 = vmatprep.subr.bf16.mxu0 0
    %1571 = vmatpush2.bf16.msra.mxu0 0
    %1572 = vmatprep.subr.bf16.mxu0 0
    %1573 = vmatpush2.bf16.msra.mxu0 0
    %1574 = vmatprep.subr.bf16.mxu0 0
    %1575 = vmatpush2.bf16.msra.mxu0 0
    %1576 = vmatprep.mubr.bf16.mxu0 0
    %1577 = vmatmul.mubr.bf16.gmra.mxu0 %v1533
    %v1578 = vpop.f32.mrf.mxu0
    %v1579 = vadd.f32 %v1518, %v1578
    %v1580 = vpop.f32.mrf.mxu0
    %v1581 = vpop.f32.mrf.mxu0
    %v1582 = vadd.f32 %v1518, %v1581
    %v1583 = vpop.f32.mrf.mxu0
    %1584 = vmatprep.mubr.bf16.mxu0 0
    %1585 = vmatmul.mubr.bf16.gmra.mxu0 %v1536
    %v1586 = vpop.f32.mrf.mxu0
    %v1587 = vadd.f32 %v1518, %v1586
    %v1588 = vpop.f32.mrf.mxu0
    %v1589 = vpop.f32.mrf.mxu0
    %v1590 = vadd.f32 %v1518, %v1589
    %v1591 = vpop.f32.mrf.mxu0
    %1592 = vmatprep.mubr.bf16.mxu0 0
    %1593 = vmatmul.mubr.bf16.gmra.mxu0 %v1539
    %v1594 = vpop.f32.mrf.mxu0
    %v1595 = vadd.f32 %v1518, %v1594
    %v1596 = vpop.f32.mrf.mxu0
    %v1597 = vpop.f32.mrf.mxu0
    %v1598 = vadd.f32 %v1518, %v1597
    %v1599 = vpop.f32.mrf.mxu0
    %1600 = vmatprep.mubr.bf16.mxu0 0
    %1601 = vmatmul.mubr.bf16.gmra.mxu0 %v1542
    %v1602 = vpop.f32.mrf.mxu0
    %v1603 = vadd.f32 %v1518, %v1602
    %v1604 = vpop.f32.mrf.mxu0
    %v1605 = vpop.f32.mrf.mxu0
    %v1606 = vadd.f32 %v1518, %v1605
    %v1607 = vpop.f32.mrf.mxu0
    %1608 = vdwg.mxu0
    %vm1609 = vcmask 64512
    %1610 = vst.msk [vmem:[#allocation10] sm:$0xff] %vm1609, %v1579
    %1611 = vst.msk [vmem:[#allocation10 + $0x8] sm:$0xff] %vm1609, %v1582
    %1612 = vst.msk [vmem:[#allocation10 + $0x10] sm:$0xff] %vm1609, %v1587
    %1613 = vst.msk [vmem:[#allocation10 + $0x18] sm:$0xff] %vm1609, %v1590
    %1614 = vst.msk [vmem:[#allocation10 + $0x20] sm:$0xff] %vm1609, %v1595
    %1615 = vst.msk [vmem:[#allocation10 + $0x28] sm:$0xff] %vm1609, %v1598
    %1616 = vst.msk [vmem:[#allocation10 + $0x30] sm:$0xff] %vm1609, %v1603
    %1617 = vst.msk [vmem:[#allocation10 + $0x38] sm:$0xff] %vm1609, %v1606
    // Predicated region
    $region46: #{tpu_custom_call.1} parent=1 // pred_check
      _
    $region47: #{tpu_custom_call.1} parent=1 // pred_check_branch
      %1619 = sbr.rel (0) target = $region49
    $region48: #{tpu_custom_call.1} parent=1 // pred_region
      %s1621 = ssub.s32 1024, 1024
      %1622 = vsyncadd [#allocation6], %s1621
      %s1623 = sshll.u32 [#allocation10], 4
      %s1624 = int_to_ptr.vmem [resolvable:$true] %s1623
      %1629 = dma.vmem_to_hbm [thread:$0]  %s1624, 1024, %s8, [#allocation6], 128, 128, 8
    $region49: #{tpu_custom_call.1} parent=1 // pred_fallthru
      _
    // Predicated region
    $region50: #{tpu_custom_call.1} parent=1 // pred_check
      _
    $region51: #{tpu_custom_call.1} parent=1 // pred_check_branch
      %1631 = sbr.rel (0) target = $region53
    $region52: #{tpu_custom_call.1} parent=1 // pred_region
      %1632 = dma.done [#allocation6], 1024
    $region53: #{tpu_custom_call.1} parent=1 // pred_fallthru
      _
    %1633 = vsyncpa [#allocation5], 1
    %1634 = vsyncpa [#allocation8], 1
    %1635 = vsyncpa [#allocation6], 1

</llo_original>
